<compile_context>
chip_gen: v7x
topology: tpu7x:2x2x1
jax: 0.10.0
libtpu: 0.0.40
codegen_flags: <defaults>
</compile_context>

<pallas_src>
import jax
import jax.numpy as jnp
from jax.experimental import pallas as pl
from jax.experimental.pallas import tpu as pltpu

LANE = 128


def lemon_kernel(x_ref, wf_ref, bf_ref, wc_ref, bc_ref, lv_ref, out_ref, acc_ref):
    """Fused (GAP+feature matmul) -> ReLU -> classifier -> softmax E[label] for one batch tile.

    Grid = (batch tiles, CHW reduction tiles); reduction axis is last / "arbitrary".

    x_ref  : [TB, TK]   f32   flattened NCHW image tile (cast to bf16 in VMEM)
    wf_ref : [TK, Fp]   bf16  feature weight tile with GAP folded in (rows pre-scaled by 1/(H*W))
    bf_ref : [1, Fp]    f32
    wc_ref : [Fp, Kp]   bf16  classifier weight, zero-padded
    bc_ref : [1, Kp]    f32   classifier bias, padded columns = -1e30 (masked from softmax)
    lv_ref : [1, Kp]    f32   label values 0..K-1, padded columns = 0
    out_ref: [1, TB]    f32   expected class value, one lane per sample (4 B/sample)
    acc_ref: [TB, Fp]   f32   feature accumulator scratch (persists across the k axis)
    """
    k = pl.program_id(1)

    @pl.when(k == 0)
    def _():
        acc_ref[...] = jnp.zeros_like(acc_ref)

    # Partial fused global-average-pool + feature projection for this CHW chunk:
    # bf16 MXU matmul, f32 accumulation.  x is cast f32->bf16 here in VMEM (no extra HBM pass).
    acc_ref[...] += jnp.dot(x_ref[...].astype(jnp.bfloat16), wf_ref[...],
                            preferred_element_type=jnp.float32)

    @pl.when(k == pl.num_programs(1) - 1)
    def _():
        feat = jnp.maximum(acc_ref[...] + bf_ref[...], 0.0)                    # [TB, Fp]

        # Classifier head: nn.Linear(n_features, n_class), padded to lane width (bf16 MXU path).
        logits = jnp.dot(feat.astype(jnp.bfloat16), wc_ref[...],
                         preferred_element_type=jnp.float32) + bc_ref[...]     # [TB, Kp]

        # softmax(dim=1) * arange(n_class) summed over classes, probs never materialized:
        #   E[label] = sum_k e_k * k / sum_k e_k     (padded columns contribute 0)
        m = jnp.max(logits, axis=1, keepdims=True)
        e = jnp.exp(logits - m)
        num = jnp.sum(e * lv_ref[...], axis=1, keepdims=True)                  # [TB, 1]
        den = jnp.sum(e, axis=1, keepdims=True)                                # [TB, 1]
        ev = num * pl.reciprocal(den, approx=False)                            # [TB, 1]

        # Lane-dense store: one XLU transpose turns the per-row column into a [1, TB] row
        # (full 128-lane vst, 4 B/sample of output traffic).
        out_ref[...] = jnp.transpose(ev)


def prepare_params(w_feat, b_feat, w_cls, b_cls, hw, f_pad=LANE, k_pad=LANE):
    """One-time host-side weight prep: fold GAP into w_feat, pad head to lane width."""
    c, f = w_feat.shape
    k = w_cls.shape[1]
    # Mean over H*W folded into the feature weight -> single well-shaped MXU matmul
    # (row c*HW + s of the flattened NCHW image multiplies w_feat[c] / HW).
    w_big = jnp.repeat(w_feat, hw, axis=0) / float(hw)                         # [C*HW, F]
    w_big = jnp.pad(w_big, ((0, 0), (0, f_pad - f))).astype(jnp.bfloat16)
    b_feat_p = jnp.pad(b_feat.reshape(1, f), ((0, 0), (0, f_pad - f))).astype(jnp.float32)
    # bf16 classifier weight: avoids v5e's multi-pass f32 MXU lowering, halves its VMEM.
    w_cls_p = jnp.pad(w_cls, ((0, f_pad - f), (0, k_pad - k))).astype(jnp.bfloat16)
    # Padded classes get bias -1e30 so exp() underflows to 0 -> excluded from the softmax.
    b_cls_p = jnp.pad(b_cls.reshape(1, k), ((0, 0), (0, k_pad - k)),
                      constant_values=-1e30).astype(jnp.float32)
    label_vals = jnp.pad(jnp.arange(k, dtype=jnp.float32).reshape(1, k),
                         ((0, 0), (0, k_pad - k)))                             # padded -> 0
    return w_big, b_feat_p, w_cls_p, b_cls_p, label_vals


def _pick_tb(b):
    """Batch tile: multiple of 128, <=1024, >=2 grid steps when possible, prefer divisors of B."""
    b_pad = pl.cdiv(b, LANE) * LANE
    if b_pad <= LANE:
        return LANE
    tb = min(1024, pl.cdiv(b_pad // 2, LANE) * LANE)       # aim for >=2 steps (v7x megacore)
    for cand in range(tb, LANE - 1, -LANE):                # avoid the batch-pad copy if we can
        if b % cand == 0:
            return cand
    return tb


def _pick_tk(chw, tb, f_pad=LANE, budget_bytes=20 * 1024 * 1024):
    """CHW reduction tile sized so 2x f32 x-tile + 2x bf16 w-tile stays within the VMEM budget."""
    max_tk = budget_bytes // (8 * tb + 4 * f_pad)          # 2*tb*tk*4 (x) + 2*tk*f_pad*2 (w)
    max_tk = max(LANE, (max_tk // LANE) * LANE)
    if chw <= max_tk:
        return chw
    for cand in range(max_tk, LANE - 1, -LANE):            # largest 128-multiple divisor of CHW
        if chw % cand == 0:
            return cand
    # TODO(synk): very large CHW that has no 128-multiple divisor would need CHW padding;
    # fall back to a single full-width tile.
    return chw


def lemon_forward(x_nchw, w_big, b_feat_p, w_cls_p, b_cls_p, label_vals, *, tb=None):
    """x_nchw: [B, C, H, W] float32 (PyTorch layout). Returns [B] float32."""
    b = x_nchw.shape[0]
    chw = x_nchw.shape[1] * x_nchw.shape[2] * x_nchw.shape[3]
    f_pad = w_big.shape[1]
    k_pad = w_cls_p.shape[1]

    if tb is None:
        tb = _pick_tb(b)
    nb = pl.cdiv(b, tb)
    b_pad = nb * tb
    tk = _pick_tk(chw, tb, f_pad)
    nk = pl.cdiv(chw, tk)

    # Layout-preserving reshape only (free) -- no dtype cast, no extra HBM pass over x;
    # the kernel casts f32 -> bf16 in VMEM right before the MXU dot.
    x2d = x_nchw.reshape(b, chw)
    if b_pad != b:
        # Ragged last batch tile: pad with zero rows (their outputs are sliced off below).
        # _pick_tb tries to choose a divisor of B so this copy never triggers at large B.
        x2d = jnp.pad(x2d, ((0, b_pad - b), (0, 0)))

    out = pl.pallas_call(
        lemon_kernel,
        out_shape=jax.ShapeDtypeStruct((nb, tb), jnp.float32),
        grid=(nb, nk),
        in_specs=[
            pl.BlockSpec((tb, tk), lambda i, k: (i, k)),        # x: streamed (batch, chw) tiles
            pl.BlockSpec((tk, f_pad), lambda i, k: (k, 0)),     # GAP-folded feature weight tiles
            pl.BlockSpec((1, f_pad), lambda i, k: (0, 0)),      # feature bias (VMEM-resident)
            pl.BlockSpec((f_pad, k_pad), lambda i, k: (0, 0)),  # classifier weight (bf16, resident)
            pl.BlockSpec((1, k_pad), lambda i, k: (0, 0)),      # classifier bias (pad = -1e30)
            pl.BlockSpec((1, k_pad), lambda i, k: (0, 0)),      # label values (pad = 0)
        ],
        out_specs=pl.BlockSpec((1, tb), lambda i, k: (i, 0)),   # lane-dense: 4 B per sample
        scratch_shapes=[pltpu.VMEM((tb, f_pad), jnp.float32)],  # feature accumulator
        compiler_params=pltpu.CompilerParams(
            dimension_semantics=("parallel", "arbitrary"),      # batch tiles across TCs; k is a reduction
            vmem_limit_bytes=32 * 1024 * 1024,                  # tiles budgeted well under this
        ),
    )(x2d, w_big, b_feat_p, w_cls_p, b_cls_p, label_vals)
    return out.reshape(-1)[:b]


if __name__ == "__main__":
    # Small shapes consistent with the module's forward: NCHW image batch -> scalar per sample.
    B, C, H, W = 2, 4, 16, 16
    n_features, n_class = 32, 4          # Config.num_class = 4

    key = jax.random.PRNGKey(0)
    kx, k1, k2, k3, k4 = jax.random.split(key, 5)
    x = jax.random.normal(kx, (B, C, H, W), jnp.float32)
    w_feat = jax.random.normal(k1, (C, n_features), jnp.float32) * 0.1
    b_feat = jax.random.normal(k2, (1, n_features), jnp.float32) * 0.01
    w_cls = jax.random.normal(k3, (n_features, n_class), jnp.float32) * 0.1
    b_cls = jax.random.normal(k4, (1, n_class), jnp.float32) * 0.01

    params = prepare_params(w_feat, b_feat, w_cls, b_cls, hw=H * W)
    out = lemon_forward(x, *params)
    out = jax.block_until_ready(out)
    assert out.shape == (B,)

    # Reference 1: identical math path (bf16 casts mirrored, padded head, f32 accumulation).
    w_big, b_feat_p, w_cls_p, b_cls_p, label_vals = params
    x2f = x.reshape(B, -1).astype(jnp.bfloat16).astype(jnp.float32)
    feat_r = jnp.maximum(x2f @ w_big.astype(jnp.float32) + b_feat_p, 0.0)
    logits_r = (feat_r.astype(jnp.bfloat16).astype(jnp.float32)
                @ w_cls_p.astype(jnp.float32) + b_cls_p)
    ref_same = jnp.sum(jax.nn.softmax(logits_r, axis=1) * label_vals, axis=1)
    assert jnp.allclose(out, ref_same, atol=5e-3), (out, ref_same)

    # Reference 2: original (stand-in) module semantics in pure f32:
    # GAP -> linear -> ReLU -> classifier -> softmax expected label.
    pooled = jnp.mean(x.reshape(B, C, H * W), axis=2)
    feat = jnp.maximum(pooled @ w_feat + b_feat, 0.0)
    logits = feat @ w_cls + b_cls
    ref_f32 = jnp.sum(jax.nn.softmax(logits, axis=1)
                      * jnp.arange(n_class, dtype=jnp.float32), axis=1)
    assert jnp.allclose(out, ref_f32, atol=5e-2), (out, ref_f32)

    print("KERNEL_OK")
</pallas_src>

<mosaic_0001>
module attributes {stable_mosaic.version = 11 : i64} {
  func.func @lemon_kernel(%arg0: i32, %arg1: i32, %arg2: memref<128x1024xf32, #tpu.memory_space<vmem>>, %arg3: memref<1024x128xbf16, #tpu.memory_space<vmem>>, %arg4: memref<1x128xf32, #tpu.memory_space<vmem>>, %arg5: memref<128x128xbf16, #tpu.memory_space<vmem>>, %arg6: memref<1x128xf32, #tpu.memory_space<vmem>>, %arg7: memref<1x128xf32, #tpu.memory_space<vmem>>, %arg8: memref<1x128xf32, #tpu.memory_space<vmem>>, %arg9: memref<128x128xf32, #tpu.memory_space<vmem>>) attributes {dimension_semantics = [#tpu.dimension_semantics<parallel>, #tpu.dimension_semantics<arbitrary>], iteration_bounds = array<i64: 1, 1>, scalar_prefetch = 0 : i64, scratch_operands = 1 : i64, tpu.core_type = #tpu.core_type<tc>, window_params = [{transform_indices = @transform_0, window_bounds = array<i64: 128, 1024>}, {transform_indices = @transform_1, window_bounds = array<i64: 1024, 128>}, {pipeline_mode = #tpu.pipeline_mode<synchronous>, transform_indices = @transform_2, window_bounds = array<i64: 1, 128>}, {pipeline_mode = #tpu.pipeline_mode<synchronous>, transform_indices = @transform_3, window_bounds = array<i64: 128, 128>}, {pipeline_mode = #tpu.pipeline_mode<synchronous>, transform_indices = @transform_4, window_bounds = array<i64: 1, 128>}, {pipeline_mode = #tpu.pipeline_mode<synchronous>, transform_indices = @transform_5, window_bounds = array<i64: 1, 128>}, {transform_indices = @transform_6, window_bounds = array<i64: 1, 128>}]} {
    %c0_i32 = arith.constant 0 : i32
    %0 = arith.cmpi eq, %arg1, %c0_i32 : i32
    %1 = arith.extui %0 : i1 to i32
    %c0_i32_0 = arith.constant 0 : i32
    %2 = arith.cmpi ne, %1, %c0_i32_0 : i32
    scf.if %2 {
      %cst_10 = arith.constant 0.000000e+00 : f32
      %13 = vector.broadcast %cst_10 : f32 to vector<128x128xf32>
      %c0_11 = arith.constant 0 : index
      %c0_12 = arith.constant 0 : index
      %14 = vector.load %arg9[%c0_11, %c0_12] : memref<128x128xf32, #tpu.memory_space<vmem>>, vector<128x128xf32>
      tpu.vector_store %arg9[%c0_11, %c0_12], %13 {strides = array<i32>} : memref<128x128xf32, #tpu.memory_space<vmem>>, vector<128x128xf32>,
    } else {
    }
    %c0 = arith.constant 0 : index
    %c0_1 = arith.constant 0 : index
    %3 = vector.load %arg9[%c0, %c0_1] : memref<128x128xf32, #tpu.memory_space<vmem>>, vector<128x128xf32>
    %c0_2 = arith.constant 0 : index
    %c0_3 = arith.constant 0 : index
    %4 = vector.load %arg2[%c0_2, %c0_3] : memref<128x1024xf32, #tpu.memory_space<vmem>>, vector<128x1024xf32>
    %5 = arith.truncf %4 : vector<128x1024xf32> to vector<128x1024xbf16>
    %c0_4 = arith.constant 0 : index
    %c0_5 = arith.constant 0 : index
    %6 = vector.load %arg3[%c0_4, %c0_5] : memref<1024x128xbf16, #tpu.memory_space<vmem>>, vector<1024x128xbf16>
    %cst = arith.constant dense<0.000000e+00> : vector<128x128xf32>
    %7 = tpu.matmul %5, %6, %cst {dimension_numbers = #tpu.dot_dimension_numbers<[1], [0], [0], [1], [0, 0, 1, 1], [], []>} : vector<128x1024xbf16>, vector<1024x128xbf16>, vector<128x128xf32> -> vector<128x128xf32>
    %8 = arith.addf %3, %7 : vector<128x128xf32>
    %c0_6 = arith.constant 0 : index
    %c0_7 = arith.constant 0 : index
    %9 = vector.load %arg9[%c0_6, %c0_7] : memref<128x128xf32, #tpu.memory_space<vmem>>, vector<128x128xf32>
    tpu.vector_store %arg9[%c0_6, %c0_7], %8 {strides = array<i32>} : memref<128x128xf32, #tpu.memory_space<vmem>>, vector<128x128xf32>,
    %c0_i32_8 = arith.constant 0 : i32
    %10 = arith.cmpi eq, %arg1, %c0_i32_8 : i32
    %11 = arith.extui %10 : i1 to i32
    %c0_i32_9 = arith.constant 0 : i32
    %12 = arith.cmpi ne, %11, %c0_i32_9 : i32
    scf.if %12 {
      %c0_10 = arith.constant 0 : index
      %c0_11 = arith.constant 0 : index
      %13 = vector.load %arg9[%c0_10, %c0_11] : memref<128x128xf32, #tpu.memory_space<vmem>>, vector<128x128xf32>
      %c0_12 = arith.constant 0 : index
      %c0_13 = arith.constant 0 : index
      %14 = vector.load %arg4[%c0_12, %c0_13] : memref<1x128xf32, #tpu.memory_space<vmem>>, vector<1x128xf32>
      %15 = vector.broadcast %14 : vector<1x128xf32> to vector<128x128xf32>
      %16 = arith.addf %13, %15 : vector<128x128xf32>
      %cst_14 = arith.constant 0.000000e+00 : f32
      %17 = vector.broadcast %cst_14 : f32 to vector<128x128xf32>
      %18 = arith.maximumf %16, %17 : vector<128x128xf32>
      %19 = arith.truncf %18 : vector<128x128xf32> to vector<128x128xbf16>
      %c0_15 = arith.constant 0 : index
      %c0_16 = arith.constant 0 : index
      %20 = vector.load %arg5[%c0_15, %c0_16] : memref<128x128xbf16, #tpu.memory_space<vmem>>, vector<128x128xbf16>
      %cst_17 = arith.constant dense<0.000000e+00> : vector<128x128xf32>
      %21 = tpu.matmul %19, %20, %cst_17 {dimension_numbers = #tpu.dot_dimension_numbers<[1], [0], [0], [1], [0, 0, 1, 1], [], []>} : vector<128x128xbf16>, vector<128x128xbf16>, vector<128x128xf32> -> vector<128x128xf32>
      %c0_18 = arith.constant 0 : index
      %c0_19 = arith.constant 0 : index
      %22 = vector.load %arg6[%c0_18, %c0_19] : memref<1x128xf32, #tpu.memory_space<vmem>>, vector<1x128xf32>
      %23 = vector.broadcast %22 : vector<1x128xf32> to vector<128x128xf32>
      %24 = arith.addf %21, %23 : vector<128x128xf32>
      %cst_20 = arith.constant dense<0xFF800000> : vector<128xf32>
      %25 = vector.multi_reduction <maximumf>, %24, %cst_20 [1] : vector<128x128xf32> to vector<128xf32>
      %26 = vector.shape_cast %25 : vector<128xf32> to vector<128x1xf32>
      %27 = vector.broadcast %26 : vector<128x1xf32> to vector<128x128xf32>
      %28 = arith.subf %24, %27 : vector<128x128xf32>
      %29 = math.exp %28 : vector<128x128xf32>
      %c0_21 = arith.constant 0 : index
      %c0_22 = arith.constant 0 : index
      %30 = vector.load %arg7[%c0_21, %c0_22] : memref<1x128xf32, #tpu.memory_space<vmem>>, vector<1x128xf32>
      %31 = vector.broadcast %30 : vector<1x128xf32> to vector<128x128xf32>
      %32 = arith.mulf %29, %31 : vector<128x128xf32>
      %cst_23 = arith.constant dense<0.000000e+00> : vector<128xf32>
      %33 = vector.multi_reduction <add>, %32, %cst_23 [1] : vector<128x128xf32> to vector<128xf32>
      %34 = vector.shape_cast %33 : vector<128xf32> to vector<128x1xf32>
      %cst_24 = arith.constant dense<0.000000e+00> : vector<128xf32>
      %35 = vector.multi_reduction <add>, %29, %cst_24 [1] : vector<128x128xf32> to vector<128xf32>
      %36 = vector.shape_cast %35 : vector<128xf32> to vector<128x1xf32>
      %37 = tpu.reciprocal %36 : vector<128x1xf32> -> vector<128x1xf32>
      %38 = arith.mulf %34, %37 : vector<128x1xf32>
      %39 = tpu.transpose %38, [1, 0] : vector<128x1xf32> -> vector<1x128xf32>
      %c0_25 = arith.constant 0 : index
      %c0_26 = arith.constant 0 : index
      %40 = vector.load %arg8[%c0_25, %c0_26] : memref<1x128xf32, #tpu.memory_space<vmem>>, vector<1x128xf32>
      tpu.vector_store %arg8[%c0_25, %c0_26], %39 {strides = array<i32>} : memref<1x128xf32, #tpu.memory_space<vmem>>, vector<1x128xf32>,
    } else {
    }
    return
  }
  func.func @transform_0(%arg0: i32, %arg1: i32) -> (i32, i32) {
    %c0_i32 = arith.constant 0 : i32
    return %arg0, %arg1 : i32, i32
  }
  func.func @transform_1(%arg0: i32, %arg1: i32) -> (i32, i32) {
    %c0_i32 = arith.constant 0 : i32
    %c0_i32_0 = arith.constant 0 : i32
    return %arg1, %c0_i32 : i32, i32
  }
  func.func @transform_2(%arg0: i32, %arg1: i32) -> (i32, i32) {
    %c0_i32 = arith.constant 0 : i32
    %c0_i32_0 = arith.constant 0 : i32
    %c0_i32_1 = arith.constant 0 : i32
    return %c0_i32, %c0_i32_0 : i32, i32
  }
  func.func @transform_3(%arg0: i32, %arg1: i32) -> (i32, i32) {
    %c0_i32 = arith.constant 0 : i32
    %c0_i32_0 = arith.constant 0 : i32
    %c0_i32_1 = arith.constant 0 : i32
    return %c0_i32, %c0_i32_0 : i32, i32
  }
  func.func @transform_4(%arg0: i32, %arg1: i32) -> (i32, i32) {
    %c0_i32 = arith.constant 0 : i32
    %c0_i32_0 = arith.constant 0 : i32
    %c0_i32_1 = arith.constant 0 : i32
    return %c0_i32, %c0_i32_0 : i32, i32
  }
  func.func @transform_5(%arg0: i32, %arg1: i32) -> (i32, i32) {
    %c0_i32 = arith.constant 0 : i32
    %c0_i32_0 = arith.constant 0 : i32
    %c0_i32_1 = arith.constant 0 : i32
    return %c0_i32, %c0_i32_0 : i32, i32
  }
  func.func @transform_6(%arg0: i32, %arg1: i32) -> (i32, i32) {
    %c0_i32 = arith.constant 0 : i32
    %c0_i32_0 = arith.constant 0 : i32
    return %arg0, %c0_i32 : i32, i32
  }
}

</mosaic_0001>

<llo_original>
// kernel: tpu_custom_call.1
$region0: #{tpu_custom_call.1}
  #allocation0 [shape = 'u32[]', space=smem, size = 0x4, offset = 0x4, fixed_abs, tag = 'smem constant byte address 0x4 - core index']
  #allocation1 [shape = 'u32[144,128]{1,0:T(1,128)}', space=vmem, size = 0x12000, scoped, tag = 'internal scratch']
  #allocation2 [shape = 'f32[128,128]{1,0:T(8,128)}', space=vmem, size = 0x10000, scoped, tag = 'scratch operand']
  %s0 = inlined_call_operand.hbm [shape: f32[128,1024], index: 0, kind: input, shape index: {}]
  %s1 = inlined_call_operand.hbm [shape: bf16[1024,128], index: 1, kind: input, shape index: {}]
  %s2 = inlined_call_operand.vmem [shape: f32[1,128], index: 2, kind: input, shape index: {}]
  %s3 = inlined_call_operand.hbm [shape: bf16[128,128], index: 3, kind: input, shape index: {}]
  %s4 = inlined_call_operand.vmem [shape: f32[1,128], index: 4, kind: input, shape index: {}]
  %s5 = inlined_call_operand.vmem [shape: f32[1,128], index: 5, kind: input, shape index: {}]
  %s6 = inlined_call_operand.hbm [shape: f32[1,128], index: 6, kind: output, shape index: {}]
  %s7 = sld [smem:[#allocation0]]
  $region54: #{tpu_custom_call.1} parent=0
    _
  %s9 = ssub.s32 1, %s7
  %s10 = scalar_select 0, %s9, %s7
  $region1: #{tpu_custom_call.1} parent=0
    #allocation3 [shape = 'u8[524288]{0}', space=vmem, size = 0x80000, scoped, tag = 'input window, operand 0, single buffered']
    #allocation4 [shape = 's32[1]{0}', space=sflag, size = 0x4, scoped, tag = 'scoped memory for tpu_custom_call.1']
    #allocation5 [shape = 's32[1]{0}', space=sflag, size = 0x4, scoped, tag = 'scoped memory for tpu_custom_call.1']
    #allocation6 [shape = 'u8[262144]{0}', space=vmem, size = 0x40000, scoped, tag = 'input window, operand 1, single buffered']
    #allocation7 [shape = 's32[1]{0}', space=sflag, size = 0x4, scoped, tag = 'scoped memory for tpu_custom_call.1']
    #allocation8 [shape = 'u8[32768]{0}', space=vmem, size = 0x8000, scoped, tag = 'input window, operand 3, single buffered']
    #allocation9 [shape = 'u8[512]{0}', space=vmem, size = 0x400, scoped, tag = 'output window, operand 0, single buffered']
    %11 = vsyncpa [#allocation4], 0
    %12 = vsyncpa [#allocation7], 0
    %13 = vsyncpa [#allocation5], 0
    // Predicated region
    $region2: #{tpu_custom_call.1} parent=1 // pred_check
      _
    $region3: #{tpu_custom_call.1} parent=1 // pred_check_branch
      %15 = sbr.rel (0) target = $region5
    $region4: #{tpu_custom_call.1} parent=1 // pred_region
      %s17 = ssub.s32 16384, 16384
      %18 = vsyncadd [#allocation4], %s17
      %s19 = sshll.u32 [#allocation3], 4
      %s20 = int_to_ptr.vmem [resolvable:$true] %s19
      %25 = dma.hbm_to_vmem [thread:$0]  %s0, 16384, %s20, [#allocation4], 1024, 1024, 64
    $region5: #{tpu_custom_call.1} parent=1 // pred_fallthru
      _
    // Predicated region
    $region6: #{tpu_custom_call.1} parent=1 // pred_check
      _
    $region7: #{tpu_custom_call.1} parent=1 // pred_check_branch
      %27 = sbr.rel (0) target = $region9
    $region8: #{tpu_custom_call.1} parent=1 // pred_region
      %s29 = ssub.s32 8192, 8192
      %30 = vsyncadd [#allocation7], %s29
      %s31 = sshll.u32 [#allocation6], 4
      %s32 = int_to_ptr.vmem [resolvable:$true] %s31
      %37 = dma.hbm_to_vmem [thread:$0]  %s1, 8192, %s32, [#allocation7], 64, 64, 4
    $region9: #{tpu_custom_call.1} parent=1 // pred_fallthru
      _
    // Predicated region
    $region10: #{tpu_custom_call.1} parent=1 // pred_check
      _
    $region11: #{tpu_custom_call.1} parent=1 // pred_check_branch
      %39 = sbr.rel (0) target = $region13
    $region12: #{tpu_custom_call.1} parent=1 // pred_region
      _
    $region13: #{tpu_custom_call.1} parent=1 // pred_fallthru
      _
    // Predicated region
    $region14: #{tpu_custom_call.1} parent=1 // pred_check
      _
    $region15: #{tpu_custom_call.1} parent=1 // pred_check_branch
      %41 = sbr.rel (0) target = $region17
    $region16: #{tpu_custom_call.1} parent=1 // pred_region
      %s43 = ssub.s32 1024, 1024
      %44 = vsyncadd [#allocation7], %s43
      %s45 = sshll.u32 [#allocation8], 4
      %s46 = int_to_ptr.vmem [resolvable:$true] %s45
      %51 = dma.hbm_to_vmem [thread:$0]  %s3, 1024, %s46, [#allocation7], 64, 64, 4
    $region17: #{tpu_custom_call.1} parent=1 // pred_fallthru
      _
    // Predicated region
    $region18: #{tpu_custom_call.1} parent=1 // pred_check
      _
    $region19: #{tpu_custom_call.1} parent=1 // pred_check_branch
      %53 = sbr.rel (0) target = $region21
    $region20: #{tpu_custom_call.1} parent=1 // pred_region
      _
    $region21: #{tpu_custom_call.1} parent=1 // pred_fallthru
      _
    // Predicated region
    $region22: #{tpu_custom_call.1} parent=1 // pred_check
      _
    $region23: #{tpu_custom_call.1} parent=1 // pred_check_branch
      %55 = sbr.rel (0) target = $region25
    $region24: #{tpu_custom_call.1} parent=1 // pred_region
      _
    $region25: #{tpu_custom_call.1} parent=1 // pred_fallthru
      _
    // Predicated region
    $region26: #{tpu_custom_call.1} parent=1 // pred_check
      _
    $region27: #{tpu_custom_call.1} parent=1 // pred_check_branch
      %57 = sbr.rel (0) target = $region29
    $region28: #{tpu_custom_call.1} parent=1 // pred_region
      %58 = dma.done [#allocation4], 16384
    $region29: #{tpu_custom_call.1} parent=1 // pred_fallthru
      _
    // Predicated region
    $region30: #{tpu_custom_call.1} parent=1 // pred_check
      _
    $region31: #{tpu_custom_call.1} parent=1 // pred_check_branch
      %60 = sbr.rel (0) target = $region33
    $region32: #{tpu_custom_call.1} parent=1 // pred_region
      %61 = dma.done [#allocation7], 8192
    $region33: #{tpu_custom_call.1} parent=1 // pred_fallthru
      _
    // Predicated region
    $region34: #{tpu_custom_call.1} parent=1 // pred_check
      _
    $region35: #{tpu_custom_call.1} parent=1 // pred_check_branch
      %63 = sbr.rel (0) target = $region37
    $region36: #{tpu_custom_call.1} parent=1 // pred_region
      %64 = dma.done [#allocation7], 1024
    $region37: #{tpu_custom_call.1} parent=1 // pred_fallthru
      _
    %p66 = scmp.eq.s32.totalorder 0, 0
    // Predicated region
    $region38: #{tpu_custom_call.1} parent=1 // pred_check
      %p67 = pneg %p66
    $region39: #{tpu_custom_call.1} parent=1 // pred_check_branch
      %69 = sbr.rel (%p67) target = $region41
    $region40: #{tpu_custom_call.1} parent=1 // pred_region
      %70 = vst [vmem:[#allocation2] sm:$0xff] 0.0
      %71 = vst [vmem:[#allocation2 + $0x8] sm:$0xff] 0.0
      %72 = vst [vmem:[#allocation2 + $0x10] sm:$0xff] 0.0
      %73 = vst [vmem:[#allocation2 + $0x18] sm:$0xff] 0.0
      %74 = vst [vmem:[#allocation2 + $0x20] sm:$0xff] 0.0
      %75 = vst [vmem:[#allocation2 + $0x28] sm:$0xff] 0.0
      %76 = vst [vmem:[#allocation2 + $0x30] sm:$0xff] 0.0
      %77 = vst [vmem:[#allocation2 + $0x38] sm:$0xff] 0.0
      %78 = vst [vmem:[#allocation2 + $0x40] sm:$0xff] 0.0
      %79 = vst [vmem:[#allocation2 + $0x48] sm:$0xff] 0.0
      %80 = vst [vmem:[#allocation2 + $0x50] sm:$0xff] 0.0
      %81 = vst [vmem:[#allocation2 + $0x58] sm:$0xff] 0.0
      %82 = vst [vmem:[#allocation2 + $0x60] sm:$0xff] 0.0
      %83 = vst [vmem:[#allocation2 + $0x68] sm:$0xff] 0.0
      %84 = vst [vmem:[#allocation2 + $0x70] sm:$0xff] 0.0
      %85 = vst [vmem:[#allocation2 + $0x78] sm:$0xff] 0.0
    $region41: #{tpu_custom_call.1} parent=1 // pred_fallthru
      _
    %v86 = vld [vmem:[#allocation2] sm:$0xff]
    %v87 = vld [vmem:[#allocation2 + $0x8] sm:$0xff]
    %v88 = vld [vmem:[#allocation2 + $0x10] sm:$0xff]
    %v89 = vld [vmem:[#allocation2 + $0x18] sm:$0xff]
    %v90 = vld [vmem:[#allocation2 + $0x20] sm:$0xff]
    %v91 = vld [vmem:[#allocation2 + $0x28] sm:$0xff]
    %v92 = vld [vmem:[#allocation2 + $0x30] sm:$0xff]
    %v93 = vld [vmem:[#allocation2 + $0x38] sm:$0xff]
    %v94 = vld [vmem:[#allocation2 + $0x40] sm:$0xff]
    %v95 = vld [vmem:[#allocation2 + $0x48] sm:$0xff]
    %v96 = vld [vmem:[#allocation2 + $0x50] sm:$0xff]
    %v97 = vld [vmem:[#allocation2 + $0x58] sm:$0xff]
    %v98 = vld [vmem:[#allocation2 + $0x60] sm:$0xff]
    %v99 = vld [vmem:[#allocation2 + $0x68] sm:$0xff]
    %v100 = vld [vmem:[#allocation2 + $0x70] sm:$0xff]
    %v101 = vld [vmem:[#allocation2 + $0x78] sm:$0xff]
    %v102 = vld [vmem:[#allocation3] sm:$0xff]
    %v103 = vld [vmem:[#allocation3 + $0x8] sm:$0xff]
    %v104 = vld [vmem:[#allocation3 + $0x10] sm:$0xff]
    %v105 = vld [vmem:[#allocation3 + $0x18] sm:$0xff]
    %v106 = vld [vmem:[#allocation3 + $0x20] sm:$0xff]
    %v107 = vld [vmem:[#allocation3 + $0x28] sm:$0xff]
    %v108 = vld [vmem:[#allocation3 + $0x30] sm:$0xff]
    %v109 = vld [vmem:[#allocation3 + $0x38] sm:$0xff]
    %v110 = vld [vmem:[#allocation3 + $0x40] sm:$0xff]
    %v111 = vld [vmem:[#allocation3 + $0x48] sm:$0xff]
    %v112 = vld [vmem:[#allocation3 + $0x50] sm:$0xff]
    %v113 = vld [vmem:[#allocation3 + $0x58] sm:$0xff]
    %v114 = vld [vmem:[#allocation3 + $0x60] sm:$0xff]
    %v115 = vld [vmem:[#allocation3 + $0x68] sm:$0xff]
    %v116 = vld [vmem:[#allocation3 + $0x70] sm:$0xff]
    %v117 = vld [vmem:[#allocation3 + $0x78] sm:$0xff]
    %v118 = vld [vmem:[#allocation3 + $0x80] sm:$0xff]
    %v119 = vld [vmem:[#allocation3 + $0x88] sm:$0xff]
    %v120 = vld [vmem:[#allocation3 + $0x90] sm:$0xff]
    %v121 = vld [vmem:[#allocation3 + $0x98] sm:$0xff]
    %v122 = vld [vmem:[#allocation3 + $0xa0] sm:$0xff]
    %v123 = vld [vmem:[#allocation3 + $0xa8] sm:$0xff]
    %v124 = vld [vmem:[#allocation3 + $0xb0] sm:$0xff]
    %v125 = vld [vmem:[#allocation3 + $0xb8] sm:$0xff]
    %v126 = vld [vmem:[#allocation3 + $0xc0] sm:$0xff]
    %v127 = vld [vmem:[#allocation3 + $0xc8] sm:$0xff]
    %v128 = vld [vmem:[#allocation3 + $0xd0] sm:$0xff]
    %v129 = vld [vmem:[#allocation3 + $0xd8] sm:$0xff]
    %v130 = vld [vmem:[#allocation3 + $0xe0] sm:$0xff]
    %v131 = vld [vmem:[#allocation3 + $0xe8] sm:$0xff]
    %v132 = vld [vmem:[#allocation3 + $0xf0] sm:$0xff]
    %v133 = vld [vmem:[#allocation3 + $0xf8] sm:$0xff]
    %v134 = vld [vmem:[#allocation3 + $0x100] sm:$0xff]
    %v135 = vld [vmem:[#allocation3 + $0x108] sm:$0xff]
    %v136 = vld [vmem:[#allocation3 + $0x110] sm:$0xff]
    %v137 = vld [vmem:[#allocation3 + $0x118] sm:$0xff]
    %v138 = vld [vmem:[#allocation3 + $0x120] sm:$0xff]
    %v139 = vld [vmem:[#allocation3 + $0x128] sm:$0xff]
    %v140 = vld [vmem:[#allocation3 + $0x130] sm:$0xff]
    %v141 = vld [vmem:[#allocation3 + $0x138] sm:$0xff]
    %v142 = vld [vmem:[#allocation3 + $0x140] sm:$0xff]
    %v143 = vld [vmem:[#allocation3 + $0x148] sm:$0xff]
    %v144 = vld [vmem:[#allocation3 + $0x150] sm:$0xff]
    %v145 = vld [vmem:[#allocation3 + $0x158] sm:$0xff]
    %v146 = vld [vmem:[#allocation3 + $0x160] sm:$0xff]
    %v147 = vld [vmem:[#allocation3 + $0x168] sm:$0xff]
    %v148 = vld [vmem:[#allocation3 + $0x170] sm:$0xff]
    %v149 = vld [vmem:[#allocation3 + $0x178] sm:$0xff]
    %v150 = vld [vmem:[#allocation3 + $0x180] sm:$0xff]
    %v151 = vld [vmem:[#allocation3 + $0x188] sm:$0xff]
    %v152 = vld [vmem:[#allocation3 + $0x190] sm:$0xff]
    %v153 = vld [vmem:[#allocation3 + $0x198] sm:$0xff]
    %v154 = vld [vmem:[#allocation3 + $0x1a0] sm:$0xff]
    %v155 = vld [vmem:[#allocation3 + $0x1a8] sm:$0xff]
    %v156 = vld [vmem:[#allocation3 + $0x1b0] sm:$0xff]
    %v157 = vld [vmem:[#allocation3 + $0x1b8] sm:$0xff]
    %v158 = vld [vmem:[#allocation3 + $0x1c0] sm:$0xff]
    %v159 = vld [vmem:[#allocation3 + $0x1c8] sm:$0xff]
    %v160 = vld [vmem:[#allocation3 + $0x1d0] sm:$0xff]
    %v161 = vld [vmem:[#allocation3 + $0x1d8] sm:$0xff]
    %v162 = vld [vmem:[#allocation3 + $0x1e0] sm:$0xff]
    %v163 = vld [vmem:[#allocation3 + $0x1e8] sm:$0xff]
    %v164 = vld [vmem:[#allocation3 + $0x1f0] sm:$0xff]
    %v165 = vld [vmem:[#allocation3 + $0x1f8] sm:$0xff]
    %v166 = vld [vmem:[#allocation3 + $0x200] sm:$0xff]
    %v167 = vld [vmem:[#allocation3 + $0x208] sm:$0xff]
    %v168 = vld [vmem:[#allocation3 + $0x210] sm:$0xff]
    %v169 = vld [vmem:[#allocation3 + $0x218] sm:$0xff]
    %v170 = vld [vmem:[#allocation3 + $0x220] sm:$0xff]
    %v171 = vld [vmem:[#allocation3 + $0x228] sm:$0xff]
    %v172 = vld [vmem:[#allocation3 + $0x230] sm:$0xff]
    %v173 = vld [vmem:[#allocation3 + $0x238] sm:$0xff]
    %v174 = vld [vmem:[#allocation3 + $0x240] sm:$0xff]
    %v175 = vld [vmem:[#allocation3 + $0x248] sm:$0xff]
    %v176 = vld [vmem:[#allocation3 + $0x250] sm:$0xff]
    %v177 = vld [vmem:[#allocation3 + $0x258] sm:$0xff]
    %v178 = vld [vmem:[#allocation3 + $0x260] sm:$0xff]
    %v179 = vld [vmem:[#allocation3 + $0x268] sm:$0xff]
    %v180 = vld [vmem:[#allocation3 + $0x270] sm:$0xff]
    %v181 = vld [vmem:[#allocation3 + $0x278] sm:$0xff]
    %v182 = vld [vmem:[#allocation3 + $0x280] sm:$0xff]
    %v183 = vld [vmem:[#allocation3 + $0x288] sm:$0xff]
    %v184 = vld [vmem:[#allocation3 + $0x290] sm:$0xff]
    %v185 = vld [vmem:[#allocation3 + $0x298] sm:$0xff]
    %v186 = vld [vmem:[#allocation3 + $0x2a0] sm:$0xff]
    %v187 = vld [vmem:[#allocation3 + $0x2a8] sm:$0xff]
    %v188 = vld [vmem:[#allocation3 + $0x2b0] sm:$0xff]
    %v189 = vld [vmem:[#allocation3 + $0x2b8] sm:$0xff]
    %v190 = vld [vmem:[#allocation3 + $0x2c0] sm:$0xff]
    %v191 = vld [vmem:[#allocation3 + $0x2c8] sm:$0xff]
    %v192 = vld [vmem:[#allocation3 + $0x2d0] sm:$0xff]
    %v193 = vld [vmem:[#allocation3 + $0x2d8] sm:$0xff]
    %v194 = vld [vmem:[#allocation3 + $0x2e0] sm:$0xff]
    %v195 = vld [vmem:[#allocation3 + $0x2e8] sm:$0xff]
    %v196 = vld [vmem:[#allocation3 + $0x2f0] sm:$0xff]
    %v197 = vld [vmem:[#allocation3 + $0x2f8] sm:$0xff]
    %v198 = vld [vmem:[#allocation3 + $0x300] sm:$0xff]
    %v199 = vld [vmem:[#allocation3 + $0x308] sm:$0xff]
    %v200 = vld [vmem:[#allocation3 + $0x310] sm:$0xff]
    %v201 = vld [vmem:[#allocation3 + $0x318] sm:$0xff]
    %v202 = vld [vmem:[#allocation3 + $0x320] sm:$0xff]
    %v203 = vld [vmem:[#allocation3 + $0x328] sm:$0xff]
    %v204 = vld [vmem:[#allocation3 + $0x330] sm:$0xff]
    %v205 = vld [vmem:[#allocation3 + $0x338] sm:$0xff]
    %v206 = vld [vmem:[#allocation3 + $0x340] sm:$0xff]
    %v207 = vld [vmem:[#allocation3 + $0x348] sm:$0xff]
    %v208 = vld [vmem:[#allocation3 + $0x350] sm:$0xff]
    %v209 = vld [vmem:[#allocation3 + $0x358] sm:$0xff]
    %v210 = vld [vmem:[#allocation3 + $0x360] sm:$0xff]
    %v211 = vld [vmem:[#allocation3 + $0x368] sm:$0xff]
    %v212 = vld [vmem:[#allocation3 + $0x370] sm:$0xff]
    %v213 = vld [vmem:[#allocation3 + $0x378] sm:$0xff]
    %v214 = vld [vmem:[#allocation3 + $0x380] sm:$0xff]
    %v215 = vld [vmem:[#allocation3 + $0x388] sm:$0xff]
    %v216 = vld [vmem:[#allocation3 + $0x390] sm:$0xff]
    %v217 = vld [vmem:[#allocation3 + $0x398] sm:$0xff]
    %v218 = vld [vmem:[#allocation3 + $0x3a0] sm:$0xff]
    %v219 = vld [vmem:[#allocation3 + $0x3a8] sm:$0xff]
    %v220 = vld [vmem:[#allocation3 + $0x3b0] sm:$0xff]
    %v221 = vld [vmem:[#allocation3 + $0x3b8] sm:$0xff]
    %v222 = vld [vmem:[#allocation3 + $0x3c0] sm:$0xff]
    %v223 = vld [vmem:[#allocation3 + $0x3c8] sm:$0xff]
    %v224 = vld [vmem:[#allocation3 + $0x3d0] sm:$0xff]
    %v225 = vld [vmem:[#allocation3 + $0x3d8] sm:$0xff]
    %v226 = vld [vmem:[#allocation3 + $0x3e0] sm:$0xff]
    %v227 = vld [vmem:[#allocation3 + $0x3e8] sm:$0xff]
    %v228 = vld [vmem:[#allocation3 + $0x3f0] sm:$0xff]
    %v229 = vld [vmem:[#allocation3 + $0x3f8] sm:$0xff]
    %v230 = vpack.c.bf16 %v110, %v102
    %v231 = vpack.c.bf16 %v111, %v103
    %v232 = vpack.c.bf16 %v112, %v104
    %v233 = vpack.c.bf16 %v113, %v105
    %v234 = vpack.c.bf16 %v114, %v106
    %v235 = vpack.c.bf16 %v115, %v107
    %v236 = vpack.c.bf16 %v116, %v108
    %v237 = vpack.c.bf16 %v117, %v109
    %v238 = vpack.c.bf16 %v126, %v118
    %v239 = vpack.c.bf16 %v127, %v119
    %v240 = vpack.c.bf16 %v128, %v120
    %v241 = vpack.c.bf16 %v129, %v121
    %v242 = vpack.c.bf16 %v130, %v122
    %v243 = vpack.c.bf16 %v131, %v123
    %v244 = vpack.c.bf16 %v132, %v124
    %v245 = vpack.c.bf16 %v133, %v125
    %v246 = vpack.c.bf16 %v142, %v134
    %v247 = vpack.c.bf16 %v143, %v135
    %v248 = vpack.c.bf16 %v144, %v136
    %v249 = vpack.c.bf16 %v145, %v137
    %v250 = vpack.c.bf16 %v146, %v138
    %v251 = vpack.c.bf16 %v147, %v139
    %v252 = vpack.c.bf16 %v148, %v140
    %v253 = vpack.c.bf16 %v149, %v141
    %v254 = vpack.c.bf16 %v158, %v150
    %v255 = vpack.c.bf16 %v159, %v151
    %v256 = vpack.c.bf16 %v160, %v152
    %v257 = vpack.c.bf16 %v161, %v153
    %v258 = vpack.c.bf16 %v162, %v154
    %v259 = vpack.c.bf16 %v163, %v155
    %v260 = vpack.c.bf16 %v164, %v156
    %v261 = vpack.c.bf16 %v165, %v157
    %v262 = vpack.c.bf16 %v174, %v166
    %v263 = vpack.c.bf16 %v175, %v167
    %v264 = vpack.c.bf16 %v176, %v168
    %v265 = vpack.c.bf16 %v177, %v169
    %v266 = vpack.c.bf16 %v178, %v170
    %v267 = vpack.c.bf16 %v179, %v171
    %v268 = vpack.c.bf16 %v180, %v172
    %v269 = vpack.c.bf16 %v181, %v173
    %v270 = vpack.c.bf16 %v190, %v182
    %v271 = vpack.c.bf16 %v191, %v183
    %v272 = vpack.c.bf16 %v192, %v184
    %v273 = vpack.c.bf16 %v193, %v185
    %v274 = vpack.c.bf16 %v194, %v186
    %v275 = vpack.c.bf16 %v195, %v187
    %v276 = vpack.c.bf16 %v196, %v188
    %v277 = vpack.c.bf16 %v197, %v189
    %v278 = vpack.c.bf16 %v206, %v198
    %v279 = vpack.c.bf16 %v207, %v199
    %v280 = vpack.c.bf16 %v208, %v200
    %v281 = vpack.c.bf16 %v209, %v201
    %v282 = vpack.c.bf16 %v210, %v202
    %v283 = vpack.c.bf16 %v211, %v203
    %v284 = vpack.c.bf16 %v212, %v204
    %v285 = vpack.c.bf16 %v213, %v205
    %v286 = vpack.c.bf16 %v222, %v214
    %v287 = vpack.c.bf16 %v223, %v215
    %v288 = vpack.c.bf16 %v224, %v216
    %v289 = vpack.c.bf16 %v225, %v217
    %v290 = vpack.c.bf16 %v226, %v218
    %v291 = vpack.c.bf16 %v227, %v219
    %v292 = vpack.c.bf16 %v228, %v220
    %v293 = vpack.c.bf16 %v229, %v221
    %v294 = vld [vmem:[#allocation6] sm:$0xf]
    %v295 = vld [vmem:[#allocation6 + $0x4] sm:$0xf]
    %v296 = vld [vmem:[#allocation6 + $0x8] sm:$0xf]
    %v297 = vld [vmem:[#allocation6 + $0xc] sm:$0xf]
    %v298 = vld [vmem:[#allocation6 + $0x10] sm:$0xf]
    %v299 = vld [vmem:[#allocation6 + $0x14] sm:$0xf]
    %v300 = vld [vmem:[#allocation6 + $0x18] sm:$0xf]
    %v301 = vld [vmem:[#allocation6 + $0x1c] sm:$0xf]
    %v302 = vld [vmem:[#allocation6 + $0x20] sm:$0xf]
    %v303 = vld [vmem:[#allocation6 + $0x24] sm:$0xf]
    %v304 = vld [vmem:[#allocation6 + $0x28] sm:$0xf]
    %v305 = vld [vmem:[#allocation6 + $0x2c] sm:$0xf]
    %v306 = vld [vmem:[#allocation6 + $0x30] sm:$0xf]
    %v307 = vld [vmem:[#allocation6 + $0x34] sm:$0xf]
    %v308 = vld [vmem:[#allocation6 + $0x38] sm:$0xf]
    %v309 = vld [vmem:[#allocation6 + $0x3c] sm:$0xf]
    %v310 = vld [vmem:[#allocation6 + $0x40] sm:$0xf]
    %v311 = vld [vmem:[#allocation6 + $0x44] sm:$0xf]
    %v312 = vld [vmem:[#allocation6 + $0x48] sm:$0xf]
    %v313 = vld [vmem:[#allocation6 + $0x4c] sm:$0xf]
    %v314 = vld [vmem:[#allocation6 + $0x50] sm:$0xf]
    %v315 = vld [vmem:[#allocation6 + $0x54] sm:$0xf]
    %v316 = vld [vmem:[#allocation6 + $0x58] sm:$0xf]
    %v317 = vld [vmem:[#allocation6 + $0x5c] sm:$0xf]
    %v318 = vld [vmem:[#allocation6 + $0x60] sm:$0xf]
    %v319 = vld [vmem:[#allocation6 + $0x64] sm:$0xf]
    %v320 = vld [vmem:[#allocation6 + $0x68] sm:$0xf]
    %v321 = vld [vmem:[#allocation6 + $0x6c] sm:$0xf]
    %v322 = vld [vmem:[#allocation6 + $0x70] sm:$0xf]
    %v323 = vld [vmem:[#allocation6 + $0x74] sm:$0xf]
    %v324 = vld [vmem:[#allocation6 + $0x78] sm:$0xf]
    %v325 = vld [vmem:[#allocation6 + $0x7c] sm:$0xf]
    %v326 = vld [vmem:[#allocation6 + $0x80] sm:$0xf]
    %v327 = vld [vmem:[#allocation6 + $0x84] sm:$0xf]
    %v328 = vld [vmem:[#allocation6 + $0x88] sm:$0xf]
    %v329 = vld [vmem:[#allocation6 + $0x8c] sm:$0xf]
    %v330 = vld [vmem:[#allocation6 + $0x90] sm:$0xf]
    %v331 = vld [vmem:[#allocation6 + $0x94] sm:$0xf]
    %v332 = vld [vmem:[#allocation6 + $0x98] sm:$0xf]
    %v333 = vld [vmem:[#allocation6 + $0x9c] sm:$0xf]
    %v334 = vld [vmem:[#allocation6 + $0xa0] sm:$0xf]
    %v335 = vld [vmem:[#allocation6 + $0xa4] sm:$0xf]
    %v336 = vld [vmem:[#allocation6 + $0xa8] sm:$0xf]
    %v337 = vld [vmem:[#allocation6 + $0xac] sm:$0xf]
    %v338 = vld [vmem:[#allocation6 + $0xb0] sm:$0xf]
    %v339 = vld [vmem:[#allocation6 + $0xb4] sm:$0xf]
    %v340 = vld [vmem:[#allocation6 + $0xb8] sm:$0xf]
    %v341 = vld [vmem:[#allocation6 + $0xbc] sm:$0xf]
    %v342 = vld [vmem:[#allocation6 + $0xc0] sm:$0xf]
    %v343 = vld [vmem:[#allocation6 + $0xc4] sm:$0xf]
    %v344 = vld [vmem:[#allocation6 + $0xc8] sm:$0xf]
    %v345 = vld [vmem:[#allocation6 + $0xcc] sm:$0xf]
    %v346 = vld [vmem:[#allocation6 + $0xd0] sm:$0xf]
    %v347 = vld [vmem:[#allocation6 + $0xd4] sm:$0xf]
    %v348 = vld [vmem:[#allocation6 + $0xd8] sm:$0xf]
    %v349 = vld [vmem:[#allocation6 + $0xdc] sm:$0xf]
    %v350 = vld [vmem:[#allocation6 + $0xe0] sm:$0xf]
    %v351 = vld [vmem:[#allocation6 + $0xe4] sm:$0xf]
    %v352 = vld [vmem:[#allocation6 + $0xe8] sm:$0xf]
    %v353 = vld [vmem:[#allocation6 + $0xec] sm:$0xf]
    %v354 = vld [vmem:[#allocation6 + $0xf0] sm:$0xf]
    %v355 = vld [vmem:[#allocation6 + $0xf4] sm:$0xf]
    %v356 = vld [vmem:[#allocation6 + $0xf8] sm:$0xf]
    %v357 = vld [vmem:[#allocation6 + $0xfc] sm:$0xf]
    %v358 = vld [vmem:[#allocation6 + $0x100] sm:$0xf]
    %v359 = vld [vmem:[#allocation6 + $0x104] sm:$0xf]
    %v360 = vld [vmem:[#allocation6 + $0x108] sm:$0xf]
    %v361 = vld [vmem:[#allocation6 + $0x10c] sm:$0xf]
    %v362 = vld [vmem:[#allocation6 + $0x110] sm:$0xf]
    %v363 = vld [vmem:[#allocation6 + $0x114] sm:$0xf]
    %v364 = vld [vmem:[#allocation6 + $0x118] sm:$0xf]
    %v365 = vld [vmem:[#allocation6 + $0x11c] sm:$0xf]
    %v366 = vld [vmem:[#allocation6 + $0x120] sm:$0xf]
    %v367 = vld [vmem:[#allocation6 + $0x124] sm:$0xf]
    %v368 = vld [vmem:[#allocation6 + $0x128] sm:$0xf]
    %v369 = vld [vmem:[#allocation6 + $0x12c] sm:$0xf]
    %v370 = vld [vmem:[#allocation6 + $0x130] sm:$0xf]
    %v371 = vld [vmem:[#allocation6 + $0x134] sm:$0xf]
    %v372 = vld [vmem:[#allocation6 + $0x138] sm:$0xf]
    %v373 = vld [vmem:[#allocation6 + $0x13c] sm:$0xf]
    %v374 = vld [vmem:[#allocation6 + $0x140] sm:$0xf]
    %v375 = vld [vmem:[#allocation6 + $0x144] sm:$0xf]
    %v376 = vld [vmem:[#allocation6 + $0x148] sm:$0xf]
    %v377 = vld [vmem:[#allocation6 + $0x14c] sm:$0xf]
    %v378 = vld [vmem:[#allocation6 + $0x150] sm:$0xf]
    %v379 = vld [vmem:[#allocation6 + $0x154] sm:$0xf]
    %v380 = vld [vmem:[#allocation6 + $0x158] sm:$0xf]
    %v381 = vld [vmem:[#allocation6 + $0x15c] sm:$0xf]
    %v382 = vld [vmem:[#allocation6 + $0x160] sm:$0xf]
    %v383 = vld [vmem:[#allocation6 + $0x164] sm:$0xf]
    %v384 = vld [vmem:[#allocation6 + $0x168] sm:$0xf]
    %v385 = vld [vmem:[#allocation6 + $0x16c] sm:$0xf]
    %v386 = vld [vmem:[#allocation6 + $0x170] sm:$0xf]
    %v387 = vld [vmem:[#allocation6 + $0x174] sm:$0xf]
    %v388 = vld [vmem:[#allocation6 + $0x178] sm:$0xf]
    %v389 = vld [vmem:[#allocation6 + $0x17c] sm:$0xf]
    %v390 = vld [vmem:[#allocation6 + $0x180] sm:$0xf]
    %v391 = vld [vmem:[#allocation6 + $0x184] sm:$0xf]
    %v392 = vld [vmem:[#allocation6 + $0x188] sm:$0xf]
    %v393 = vld [vmem:[#allocation6 + $0x18c] sm:$0xf]
    %v394 = vld [vmem:[#allocation6 + $0x190] sm:$0xf]
    %v395 = vld [vmem:[#allocation6 + $0x194] sm:$0xf]
    %v396 = vld [vmem:[#allocation6 + $0x198] sm:$0xf]
    %v397 = vld [vmem:[#allocation6 + $0x19c] sm:$0xf]
    %v398 = vld [vmem:[#allocation6 + $0x1a0] sm:$0xf]
    %v399 = vld [vmem:[#allocation6 + $0x1a4] sm:$0xf]
    %v400 = vld [vmem:[#allocation6 + $0x1a8] sm:$0xf]
    %v401 = vld [vmem:[#allocation6 + $0x1ac] sm:$0xf]
    %v402 = vld [vmem:[#allocation6 + $0x1b0] sm:$0xf]
    %v403 = vld [vmem:[#allocation6 + $0x1b4] sm:$0xf]
    %v404 = vld [vmem:[#allocation6 + $0x1b8] sm:$0xf]
    %v405 = vld [vmem:[#allocation6 + $0x1bc] sm:$0xf]
    %v406 = vld [vmem:[#allocation6 + $0x1c0] sm:$0xf]
    %v407 = vld [vmem:[#allocation6 + $0x1c4] sm:$0xf]
    %v408 = vld [vmem:[#allocation6 + $0x1c8] sm:$0xf]
    %v409 = vld [vmem:[#allocation6 + $0x1cc] sm:$0xf]
    %v410 = vld [vmem:[#allocation6 + $0x1d0] sm:$0xf]
    %v411 = vld [vmem:[#allocation6 + $0x1d4] sm:$0xf]
    %v412 = vld [vmem:[#allocation6 + $0x1d8] sm:$0xf]
    %v413 = vld [vmem:[#allocation6 + $0x1dc] sm:$0xf]
    %v414 = vld [vmem:[#allocation6 + $0x1e0] sm:$0xf]
    %v415 = vld [vmem:[#allocation6 + $0x1e4] sm:$0xf]
    %v416 = vld [vmem:[#allocation6 + $0x1e8] sm:$0xf]
    %v417 = vld [vmem:[#allocation6 + $0x1ec] sm:$0xf]
    %v418 = vld [vmem:[#allocation6 + $0x1f0] sm:$0xf]
    %v419 = vld [vmem:[#allocation6 + $0x1f4] sm:$0xf]
    %v420 = vld [vmem:[#allocation6 + $0x1f8] sm:$0xf]
    %v421 = vld [vmem:[#allocation6 + $0x1fc] sm:$0xf]
    %v550 = vunpack.c.l.b16 %v294
    %v551 = vunpack.c.l.b16 %v295
    %v552 = vunpack.c.l.b16 %v296
    %v553 = vunpack.c.l.b16 %v297
    %v554 = vunpack.c.l.b16 %v298
    %v555 = vunpack.c.l.b16 %v299
    %v556 = vunpack.c.l.b16 %v300
    %v557 = vunpack.c.l.b16 %v301
    %v558 = vunpack.c.l.b16 %v302
    %v559 = vunpack.c.l.b16 %v303
    %v560 = vunpack.c.l.b16 %v304
    %v561 = vunpack.c.l.b16 %v305
    %v562 = vunpack.c.l.b16 %v306
    %v563 = vunpack.c.l.b16 %v307
    %v564 = vunpack.c.l.b16 %v308
    %v565 = vunpack.c.l.b16 %v309
    %v566 = vunpack.c.l.b16 %v310
    %v567 = vunpack.c.l.b16 %v311
    %v568 = vunpack.c.l.b16 %v312
    %v569 = vunpack.c.l.b16 %v313
    %v570 = vunpack.c.l.b16 %v314
    %v571 = vunpack.c.l.b16 %v315
    %v572 = vunpack.c.l.b16 %v316
    %v573 = vunpack.c.l.b16 %v317
    %v574 = vunpack.c.l.b16 %v318
    %v575 = vunpack.c.l.b16 %v319
    %v576 = vunpack.c.l.b16 %v320
    %v577 = vunpack.c.l.b16 %v321
    %v578 = vunpack.c.l.b16 %v322
    %v579 = vunpack.c.l.b16 %v323
    %v580 = vunpack.c.l.b16 %v324
    %v581 = vunpack.c.l.b16 %v325
    %v582 = vunpack.c.l.b16 %v326
    %v583 = vunpack.c.l.b16 %v327
    %v584 = vunpack.c.l.b16 %v328
    %v585 = vunpack.c.l.b16 %v329
    %v586 = vunpack.c.l.b16 %v330
    %v587 = vunpack.c.l.b16 %v331
    %v588 = vunpack.c.l.b16 %v332
    %v589 = vunpack.c.l.b16 %v333
    %v590 = vunpack.c.l.b16 %v334
    %v591 = vunpack.c.l.b16 %v335
    %v592 = vunpack.c.l.b16 %v336
    %v593 = vunpack.c.l.b16 %v337
    %v594 = vunpack.c.l.b16 %v338
    %v595 = vunpack.c.l.b16 %v339
    %v596 = vunpack.c.l.b16 %v340
    %v597 = vunpack.c.l.b16 %v341
    %v598 = vunpack.c.l.b16 %v342
    %v599 = vunpack.c.l.b16 %v343
    %v600 = vunpack.c.l.b16 %v344
    %v601 = vunpack.c.l.b16 %v345
    %v602 = vunpack.c.l.b16 %v346
    %v603 = vunpack.c.l.b16 %v347
    %v604 = vunpack.c.l.b16 %v348
    %v605 = vunpack.c.l.b16 %v349
    %v606 = vunpack.c.l.b16 %v350
    %v607 = vunpack.c.l.b16 %v351
    %v608 = vunpack.c.l.b16 %v352
    %v609 = vunpack.c.l.b16 %v353
    %v610 = vunpack.c.l.b16 %v354
    %v611 = vunpack.c.l.b16 %v355
    %v612 = vunpack.c.l.b16 %v356
    %v613 = vunpack.c.l.b16 %v357
    %v614 = vunpack.c.l.b16 %v358
    %v615 = vunpack.c.l.b16 %v359
    %v616 = vunpack.c.l.b16 %v360
    %v617 = vunpack.c.l.b16 %v361
    %v618 = vunpack.c.l.b16 %v362
    %v619 = vunpack.c.l.b16 %v363
    %v620 = vunpack.c.l.b16 %v364
    %v621 = vunpack.c.l.b16 %v365
    %v622 = vunpack.c.l.b16 %v366
    %v623 = vunpack.c.l.b16 %v367
    %v624 = vunpack.c.l.b16 %v368
    %v625 = vunpack.c.l.b16 %v369
    %v626 = vunpack.c.l.b16 %v370
    %v627 = vunpack.c.l.b16 %v371
    %v628 = vunpack.c.l.b16 %v372
    %v629 = vunpack.c.l.b16 %v373
    %v630 = vunpack.c.l.b16 %v374
    %v631 = vunpack.c.l.b16 %v375
    %v632 = vunpack.c.l.b16 %v376
    %v633 = vunpack.c.l.b16 %v377
    %v634 = vunpack.c.l.b16 %v378
    %v635 = vunpack.c.l.b16 %v379
    %v636 = vunpack.c.l.b16 %v380
    %v637 = vunpack.c.l.b16 %v381
    %v638 = vunpack.c.l.b16 %v382
    %v639 = vunpack.c.l.b16 %v383
    %v640 = vunpack.c.l.b16 %v384
    %v641 = vunpack.c.l.b16 %v385
    %v642 = vunpack.c.l.b16 %v386
    %v643 = vunpack.c.l.b16 %v387
    %v644 = vunpack.c.l.b16 %v388
    %v645 = vunpack.c.l.b16 %v389
    %v646 = vunpack.c.l.b16 %v390
    %v647 = vunpack.c.l.b16 %v391
    %v648 = vunpack.c.l.b16 %v392
    %v649 = vunpack.c.l.b16 %v393
    %v650 = vunpack.c.l.b16 %v394
    %v651 = vunpack.c.l.b16 %v395
    %v652 = vunpack.c.l.b16 %v396
    %v653 = vunpack.c.l.b16 %v397
    %v654 = vunpack.c.l.b16 %v398
    %v655 = vunpack.c.l.b16 %v399
    %v656 = vunpack.c.l.b16 %v400
    %v657 = vunpack.c.l.b16 %v401
    %v658 = vunpack.c.l.b16 %v402
    %v659 = vunpack.c.l.b16 %v403
    %v660 = vunpack.c.l.b16 %v404
    %v661 = vunpack.c.l.b16 %v405
    %v662 = vunpack.c.l.b16 %v406
    %v663 = vunpack.c.l.b16 %v407
    %v664 = vunpack.c.l.b16 %v408
    %v665 = vunpack.c.l.b16 %v409
    %v666 = vunpack.c.l.b16 %v410
    %v667 = vunpack.c.l.b16 %v411
    %v668 = vunpack.c.l.b16 %v412
    %v669 = vunpack.c.l.b16 %v413
    %v670 = vunpack.c.l.b16 %v414
    %v671 = vunpack.c.l.b16 %v415
    %v672 = vunpack.c.l.b16 %v416
    %v673 = vunpack.c.l.b16 %v417
    %v674 = vunpack.c.l.b16 %v418
    %v675 = vunpack.c.l.b16 %v419
    %v676 = vunpack.c.l.b16 %v420
    %v677 = vunpack.c.l.b16 %v421
    %v678 = vpack.c.b16 %v551, %v550
    %v679 = vpack.c.b16 %v553, %v552
    %v680 = vpack.c.b16 %v555, %v554
    %v681 = vpack.c.b16 %v557, %v556
    %v682 = vpack.c.b16 %v559, %v558
    %v683 = vpack.c.b16 %v561, %v560
    %v684 = vpack.c.b16 %v563, %v562
    %v685 = vpack.c.b16 %v565, %v564
    %v686 = vpack.c.b16 %v567, %v566
    %v687 = vpack.c.b16 %v569, %v568
    %v688 = vpack.c.b16 %v571, %v570
    %v689 = vpack.c.b16 %v573, %v572
    %v690 = vpack.c.b16 %v575, %v574
    %v691 = vpack.c.b16 %v577, %v576
    %v692 = vpack.c.b16 %v579, %v578
    %v693 = vpack.c.b16 %v581, %v580
    %v694 = vpack.c.b16 %v583, %v582
    %v695 = vpack.c.b16 %v585, %v584
    %v696 = vpack.c.b16 %v587, %v586
    %v697 = vpack.c.b16 %v589, %v588
    %v698 = vpack.c.b16 %v591, %v590
    %v699 = vpack.c.b16 %v593, %v592
    %v700 = vpack.c.b16 %v595, %v594
    %v701 = vpack.c.b16 %v597, %v596
    %v702 = vpack.c.b16 %v599, %v598
    %v703 = vpack.c.b16 %v601, %v600
    %v704 = vpack.c.b16 %v603, %v602
    %v705 = vpack.c.b16 %v605, %v604
    %v706 = vpack.c.b16 %v607, %v606
    %v707 = vpack.c.b16 %v609, %v608
    %v708 = vpack.c.b16 %v611, %v610
    %v709 = vpack.c.b16 %v613, %v612
    %v710 = vpack.c.b16 %v615, %v614
    %v711 = vpack.c.b16 %v617, %v616
    %v712 = vpack.c.b16 %v619, %v618
    %v713 = vpack.c.b16 %v621, %v620
    %v714 = vpack.c.b16 %v623, %v622
    %v715 = vpack.c.b16 %v625, %v624
    %v716 = vpack.c.b16 %v627, %v626
    %v717 = vpack.c.b16 %v629, %v628
    %v718 = vpack.c.b16 %v631, %v630
    %v719 = vpack.c.b16 %v633, %v632
    %v720 = vpack.c.b16 %v635, %v634
    %v721 = vpack.c.b16 %v637, %v636
    %v722 = vpack.c.b16 %v639, %v638
    %v723 = vpack.c.b16 %v641, %v640
    %v724 = vpack.c.b16 %v643, %v642
    %v725 = vpack.c.b16 %v645, %v644
    %v726 = vpack.c.b16 %v647, %v646
    %v727 = vpack.c.b16 %v649, %v648
    %v728 = vpack.c.b16 %v651, %v650
    %v729 = vpack.c.b16 %v653, %v652
    %v730 = vpack.c.b16 %v655, %v654
    %v731 = vpack.c.b16 %v657, %v656
    %v732 = vpack.c.b16 %v659, %v658
    %v733 = vpack.c.b16 %v661, %v660
    %v734 = vpack.c.b16 %v663, %v662
    %v735 = vpack.c.b16 %v665, %v664
    %v736 = vpack.c.b16 %v667, %v666
    %v737 = vpack.c.b16 %v669, %v668
    %v738 = vpack.c.b16 %v671, %v670
    %v739 = vpack.c.b16 %v673, %v672
    %v740 = vpack.c.b16 %v675, %v674
    %v741 = vpack.c.b16 %v677, %v676
    %806 = vmatprep.subr.bf16.mxu0 0
    %807 = vmatpush1.bf16.msra.mxu0 %v678
    %808 = vmatprep.subr.bf16.mxu0 0
    %809 = vmatpush1.bf16.msra.mxu0 %v679
    %810 = vmatprep.subr.bf16.mxu0 0
    %811 = vmatpush1.bf16.msra.mxu0 %v680
    %812 = vmatprep.subr.bf16.mxu0 0
    %813 = vmatpush1.bf16.msra.mxu0 %v681
    %814 = vmatprep.subr.bf16.mxu0 0
    %815 = vmatpush1.bf16.msra.mxu0 %v682
    %816 = vmatprep.subr.bf16.mxu0 0
    %817 = vmatpush1.bf16.msra.mxu0 %v683
    %818 = vmatprep.subr.bf16.mxu0 0
    %819 = vmatpush1.bf16.msra.mxu0 %v684
    %820 = vmatprep.subr.bf16.mxu0 0
    %821 = vmatpush1.bf16.msra.mxu0 %v685
    %822 = vmatprep.subr.bf16.mxu0 0
    %823 = vmatpush1.bf16.msra.mxu0 %v686
    %824 = vmatprep.subr.bf16.mxu0 0
    %825 = vmatpush1.bf16.msra.mxu0 %v687
    %826 = vmatprep.subr.bf16.mxu0 0
    %827 = vmatpush1.bf16.msra.mxu0 %v688
    %828 = vmatprep.subr.bf16.mxu0 0
    %829 = vmatpush1.bf16.msra.mxu0 %v689
    %830 = vmatprep.subr.bf16.mxu0 0
    %831 = vmatpush1.bf16.msra.mxu0 %v690
    %832 = vmatprep.subr.bf16.mxu0 0
    %833 = vmatpush1.bf16.msra.mxu0 %v691
    %834 = vmatprep.subr.bf16.mxu0 0
    %835 = vmatpush1.bf16.msra.mxu0 %v692
    %836 = vmatprep.subr.bf16.mxu0 0
    %837 = vmatpush1.bf16.msra.mxu0 %v693
    %838 = vmatprep.mubr.bf16.mxu0 %v231
    %839 = vmatmul.mubr.bf16.gmra.mrb[0].mxu0 %v230
    %v840 = vpop.f32.mrb[0].mxu0
    %v841 = vadd.f32 0.0, %v840
    %v842 = vpop.f32.mrb[0].mxu0
    %v843 = vpop.f32.mrb[0].mxu0
    %v844 = vadd.f32 0.0, %v843
    %v845 = vpop.f32.mrb[0].mxu0
    %846 = vmatprep.mubr.bf16.mxu0 %v239
    %847 = vmatmul.mubr.bf16.gmra.mrb[0].mxu0 %v238
    %v848 = vpop.f32.mrb[0].mxu0
    %v849 = vadd.f32 0.0, %v848
    %v850 = vpop.f32.mrb[0].mxu0
    %v851 = vpop.f32.mrb[0].mxu0
    %v852 = vadd.f32 0.0, %v851
    %v853 = vpop.f32.mrb[0].mxu0
    %854 = vmatprep.mubr.bf16.mxu0 %v247
    %855 = vmatmul.mubr.bf16.gmra.mrb[0].mxu0 %v246
    %v856 = vpop.f32.mrb[0].mxu0
    %v857 = vadd.f32 0.0, %v856
    %v858 = vpop.f32.mrb[0].mxu0
    %v859 = vpop.f32.mrb[0].mxu0
    %v860 = vadd.f32 0.0, %v859
    %v861 = vpop.f32.mrb[0].mxu0
    %862 = vmatprep.mubr.bf16.mxu0 %v255
    %863 = vmatmul.mubr.bf16.gmra.mrb[0].mxu0 %v254
    %v864 = vpop.f32.mrb[0].mxu0
    %v865 = vadd.f32 0.0, %v864
    %v866 = vpop.f32.mrb[0].mxu0
    %v867 = vpop.f32.mrb[0].mxu0
    %v868 = vadd.f32 0.0, %v867
    %v869 = vpop.f32.mrb[0].mxu0
    %870 = vmatprep.mubr.bf16.mxu0 %v263
    %871 = vmatmul.mubr.bf16.gmra.mrb[0].mxu0 %v262
    %v872 = vpop.f32.mrb[0].mxu0
    %v873 = vadd.f32 0.0, %v872
    %v874 = vpop.f32.mrb[0].mxu0
    %v875 = vpop.f32.mrb[0].mxu0
    %v876 = vadd.f32 0.0, %v875
    %v877 = vpop.f32.mrb[0].mxu0
    %878 = vmatprep.mubr.bf16.mxu0 %v271
    %879 = vmatmul.mubr.bf16.gmra.mrb[0].mxu0 %v270
    %v880 = vpop.f32.mrb[0].mxu0
    %v881 = vadd.f32 0.0, %v880
    %v882 = vpop.f32.mrb[0].mxu0
    %v883 = vpop.f32.mrb[0].mxu0
    %v884 = vadd.f32 0.0, %v883
    %v885 = vpop.f32.mrb[0].mxu0
    %886 = vmatprep.mubr.bf16.mxu0 %v279
    %887 = vmatmul.mubr.bf16.gmra.mrb[0].mxu0 %v278
    %v888 = vpop.f32.mrb[0].mxu0
    %v889 = vadd.f32 0.0, %v888
    %v890 = vpop.f32.mrb[0].mxu0
    %v891 = vpop.f32.mrb[0].mxu0
    %v892 = vadd.f32 0.0, %v891
    %v893 = vpop.f32.mrb[0].mxu0
    %894 = vmatprep.mubr.bf16.mxu0 %v287
    %895 = vmatmul.mubr.bf16.gmra.mrb[0].mxu0 %v286
    %v896 = vpop.f32.mrb[0].mxu0
    %v897 = vadd.f32 0.0, %v896
    %v898 = vpop.f32.mrb[0].mxu0
    %v899 = vpop.f32.mrb[0].mxu0
    %v900 = vadd.f32 0.0, %v899
    %v901 = vpop.f32.mrb[0].mxu0
    %902 = vdwg.mxu0
    %903 = vmatprep.subr.bf16.mxu0 0
    %904 = vmatpush1.bf16.msra.mxu0 %v694
    %905 = vmatprep.subr.bf16.mxu0 0
    %906 = vmatpush1.bf16.msra.mxu0 %v695
    %907 = vmatprep.subr.bf16.mxu0 0
    %908 = vmatpush1.bf16.msra.mxu0 %v696
    %909 = vmatprep.subr.bf16.mxu0 0
    %910 = vmatpush1.bf16.msra.mxu0 %v697
    %911 = vmatprep.subr.bf16.mxu0 0
    %912 = vmatpush1.bf16.msra.mxu0 %v698
    %913 = vmatprep.subr.bf16.mxu0 0
    %914 = vmatpush1.bf16.msra.mxu0 %v699
    %915 = vmatprep.subr.bf16.mxu0 0
    %916 = vmatpush1.bf16.msra.mxu0 %v700
    %917 = vmatprep.subr.bf16.mxu0 0
    %918 = vmatpush1.bf16.msra.mxu0 %v701
    %919 = vmatprep.subr.bf16.mxu0 0
    %920 = vmatpush1.bf16.msra.mxu0 %v702
    %921 = vmatprep.subr.bf16.mxu0 0
    %922 = vmatpush1.bf16.msra.mxu0 %v703
    %923 = vmatprep.subr.bf16.mxu0 0
    %924 = vmatpush1.bf16.msra.mxu0 %v704
    %925 = vmatprep.subr.bf16.mxu0 0
    %926 = vmatpush1.bf16.msra.mxu0 %v705
    %927 = vmatprep.subr.bf16.mxu0 0
    %928 = vmatpush1.bf16.msra.mxu0 %v706
    %929 = vmatprep.subr.bf16.mxu0 0
    %930 = vmatpush1.bf16.msra.mxu0 %v707
    %931 = vmatprep.subr.bf16.mxu0 0
    %932 = vmatpush1.bf16.msra.mxu0 %v708
    %933 = vmatprep.subr.bf16.mxu0 0
    %934 = vmatpush1.bf16.msra.mxu0 %v709
    %935 = vmatprep.mubr.bf16.mxu0 %v233
    %936 = vmatmul.mubr.bf16.gmra.mrb[0].mxu0 %v232
    %v937 = vpop.f32.mrb[0].mxu0
    %v938 = vadd.f32 %v841, %v937
    %v939 = vpop.f32.mrb[0].mxu0
    %v940 = vpop.f32.mrb[0].mxu0
    %v941 = vadd.f32 %v844, %v940
    %v942 = vpop.f32.mrb[0].mxu0
    %943 = vmatprep.mubr.bf16.mxu0 %v241
    %944 = vmatmul.mubr.bf16.gmra.mrb[0].mxu0 %v240
    %v945 = vpop.f32.mrb[0].mxu0
    %v946 = vadd.f32 %v849, %v945
    %v947 = vpop.f32.mrb[0].mxu0
    %v948 = vpop.f32.mrb[0].mxu0
    %v949 = vadd.f32 %v852, %v948
    %v950 = vpop.f32.mrb[0].mxu0
    %951 = vmatprep.mubr.bf16.mxu0 %v249
    %952 = vmatmul.mubr.bf16.gmra.mrb[0].mxu0 %v248
    %v953 = vpop.f32.mrb[0].mxu0
    %v954 = vadd.f32 %v857, %v953
    %v955 = vpop.f32.mrb[0].mxu0
    %v956 = vpop.f32.mrb[0].mxu0
    %v957 = vadd.f32 %v860, %v956
    %v958 = vpop.f32.mrb[0].mxu0
    %959 = vmatprep.mubr.bf16.mxu0 %v257
    %960 = vmatmul.mubr.bf16.gmra.mrb[0].mxu0 %v256
    %v961 = vpop.f32.mrb[0].mxu0
    %v962 = vadd.f32 %v865, %v961
    %v963 = vpop.f32.mrb[0].mxu0
    %v964 = vpop.f32.mrb[0].mxu0
    %v965 = vadd.f32 %v868, %v964
    %v966 = vpop.f32.mrb[0].mxu0
    %967 = vmatprep.mubr.bf16.mxu0 %v265
    %968 = vmatmul.mubr.bf16.gmra.mrb[0].mxu0 %v264
    %v969 = vpop.f32.mrb[0].mxu0
    %v970 = vadd.f32 %v873, %v969
    %v971 = vpop.f32.mrb[0].mxu0
    %v972 = vpop.f32.mrb[0].mxu0
    %v973 = vadd.f32 %v876, %v972
    %v974 = vpop.f32.mrb[0].mxu0
    %975 = vmatprep.mubr.bf16.mxu0 %v273
    %976 = vmatmul.mubr.bf16.gmra.mrb[0].mxu0 %v272
    %v977 = vpop.f32.mrb[0].mxu0
    %v978 = vadd.f32 %v881, %v977
    %v979 = vpop.f32.mrb[0].mxu0
    %v980 = vpop.f32.mrb[0].mxu0
    %v981 = vadd.f32 %v884, %v980
    %v982 = vpop.f32.mrb[0].mxu0
    %983 = vmatprep.mubr.bf16.mxu0 %v281
    %984 = vmatmul.mubr.bf16.gmra.mrb[0].mxu0 %v280
    %v985 = vpop.f32.mrb[0].mxu0
    %v986 = vadd.f32 %v889, %v985
    %v987 = vpop.f32.mrb[0].mxu0
    %v988 = vpop.f32.mrb[0].mxu0
    %v989 = vadd.f32 %v892, %v988
    %v990 = vpop.f32.mrb[0].mxu0
    %991 = vmatprep.mubr.bf16.mxu0 %v289
    %992 = vmatmul.mubr.bf16.gmra.mrb[0].mxu0 %v288
    %v993 = vpop.f32.mrb[0].mxu0
    %v994 = vadd.f32 %v897, %v993
    %v995 = vpop.f32.mrb[0].mxu0
    %v996 = vpop.f32.mrb[0].mxu0
    %v997 = vadd.f32 %v900, %v996
    %v998 = vpop.f32.mrb[0].mxu0
    %999 = vdwg.mxu0
    %1000 = vmatprep.subr.bf16.mxu0 0
    %1001 = vmatpush1.bf16.msra.mxu0 %v710
    %1002 = vmatprep.subr.bf16.mxu0 0
    %1003 = vmatpush1.bf16.msra.mxu0 %v711
    %1004 = vmatprep.subr.bf16.mxu0 0
    %1005 = vmatpush1.bf16.msra.mxu0 %v712
    %1006 = vmatprep.subr.bf16.mxu0 0
    %1007 = vmatpush1.bf16.msra.mxu0 %v713
    %1008 = vmatprep.subr.bf16.mxu0 0
    %1009 = vmatpush1.bf16.msra.mxu0 %v714
    %1010 = vmatprep.subr.bf16.mxu0 0
    %1011 = vmatpush1.bf16.msra.mxu0 %v715
    %1012 = vmatprep.subr.bf16.mxu0 0
    %1013 = vmatpush1.bf16.msra.mxu0 %v716
    %1014 = vmatprep.subr.bf16.mxu0 0
    %1015 = vmatpush1.bf16.msra.mxu0 %v717
    %1016 = vmatprep.subr.bf16.mxu0 0
    %1017 = vmatpush1.bf16.msra.mxu0 %v718
    %1018 = vmatprep.subr.bf16.mxu0 0
    %1019 = vmatpush1.bf16.msra.mxu0 %v719
    %1020 = vmatprep.subr.bf16.mxu0 0
    %1021 = vmatpush1.bf16.msra.mxu0 %v720
    %1022 = vmatprep.subr.bf16.mxu0 0
    %1023 = vmatpush1.bf16.msra.mxu0 %v721
    %1024 = vmatprep.subr.bf16.mxu0 0
    %1025 = vmatpush1.bf16.msra.mxu0 %v722
    %1026 = vmatprep.subr.bf16.mxu0 0
    %1027 = vmatpush1.bf16.msra.mxu0 %v723
    %1028 = vmatprep.subr.bf16.mxu0 0
    %1029 = vmatpush1.bf16.msra.mxu0 %v724
    %1030 = vmatprep.subr.bf16.mxu0 0
    %1031 = vmatpush1.bf16.msra.mxu0 %v725
    %1032 = vmatprep.mubr.bf16.mxu0 %v235
    %1033 = vmatmul.mubr.bf16.gmra.mrb[0].mxu0 %v234
    %v1034 = vpop.f32.mrb[0].mxu0
    %v1035 = vadd.f32 %v938, %v1034
    %v1036 = vpop.f32.mrb[0].mxu0
    %v1037 = vpop.f32.mrb[0].mxu0
    %v1038 = vadd.f32 %v941, %v1037
    %v1039 = vpop.f32.mrb[0].mxu0
    %1040 = vmatprep.mubr.bf16.mxu0 %v243
    %1041 = vmatmul.mubr.bf16.gmra.mrb[0].mxu0 %v242
    %v1042 = vpop.f32.mrb[0].mxu0
    %v1043 = vadd.f32 %v946, %v1042
    %v1044 = vpop.f32.mrb[0].mxu0
    %v1045 = vpop.f32.mrb[0].mxu0
    %v1046 = vadd.f32 %v949, %v1045
    %v1047 = vpop.f32.mrb[0].mxu0
    %1048 = vmatprep.mubr.bf16.mxu0 %v251
    %1049 = vmatmul.mubr.bf16.gmra.mrb[0].mxu0 %v250
    %v1050 = vpop.f32.mrb[0].mxu0
    %v1051 = vadd.f32 %v954, %v1050
    %v1052 = vpop.f32.mrb[0].mxu0
    %v1053 = vpop.f32.mrb[0].mxu0
    %v1054 = vadd.f32 %v957, %v1053
    %v1055 = vpop.f32.mrb[0].mxu0
    %1056 = vmatprep.mubr.bf16.mxu0 %v259
    %1057 = vmatmul.mubr.bf16.gmra.mrb[0].mxu0 %v258
    %v1058 = vpop.f32.mrb[0].mxu0
    %v1059 = vadd.f32 %v962, %v1058
    %v1060 = vpop.f32.mrb[0].mxu0
    %v1061 = vpop.f32.mrb[0].mxu0
    %v1062 = vadd.f32 %v965, %v1061
    %v1063 = vpop.f32.mrb[0].mxu0
    %1064 = vmatprep.mubr.bf16.mxu0 %v267
    %1065 = vmatmul.mubr.bf16.gmra.mrb[0].mxu0 %v266
    %v1066 = vpop.f32.mrb[0].mxu0
    %v1067 = vadd.f32 %v970, %v1066
    %v1068 = vpop.f32.mrb[0].mxu0
    %v1069 = vpop.f32.mrb[0].mxu0
    %v1070 = vadd.f32 %v973, %v1069
    %v1071 = vpop.f32.mrb[0].mxu0
    %1072 = vmatprep.mubr.bf16.mxu0 %v275
    %1073 = vmatmul.mubr.bf16.gmra.mrb[0].mxu0 %v274
    %v1074 = vpop.f32.mrb[0].mxu0
    %v1075 = vadd.f32 %v978, %v1074
    %v1076 = vpop.f32.mrb[0].mxu0
    %v1077 = vpop.f32.mrb[0].mxu0
    %v1078 = vadd.f32 %v981, %v1077
    %v1079 = vpop.f32.mrb[0].mxu0
    %1080 = vmatprep.mubr.bf16.mxu0 %v283
    %1081 = vmatmul.mubr.bf16.gmra.mrb[0].mxu0 %v282
    %v1082 = vpop.f32.mrb[0].mxu0
    %v1083 = vadd.f32 %v986, %v1082
    %v1084 = vpop.f32.mrb[0].mxu0
    %v1085 = vpop.f32.mrb[0].mxu0
    %v1086 = vadd.f32 %v989, %v1085
    %v1087 = vpop.f32.mrb[0].mxu0
    %1088 = vmatprep.mubr.bf16.mxu0 %v291
    %1089 = vmatmul.mubr.bf16.gmra.mrb[0].mxu0 %v290
    %v1090 = vpop.f32.mrb[0].mxu0
    %v1091 = vadd.f32 %v994, %v1090
    %v1092 = vpop.f32.mrb[0].mxu0
    %v1093 = vpop.f32.mrb[0].mxu0
    %v1094 = vadd.f32 %v997, %v1093
    %v1095 = vpop.f32.mrb[0].mxu0
    %1096 = vdwg.mxu0
    %1097 = vmatprep.subr.bf16.mxu0 0
    %1098 = vmatpush1.bf16.msra.mxu0 %v726
    %1099 = vmatprep.subr.bf16.mxu0 0
    %1100 = vmatpush1.bf16.msra.mxu0 %v727
    %1101 = vmatprep.subr.bf16.mxu0 0
    %1102 = vmatpush1.bf16.msra.mxu0 %v728
    %1103 = vmatprep.subr.bf16.mxu0 0
    %1104 = vmatpush1.bf16.msra.mxu0 %v729
    %1105 = vmatprep.subr.bf16.mxu0 0
    %1106 = vmatpush1.bf16.msra.mxu0 %v730
    %1107 = vmatprep.subr.bf16.mxu0 0
    %1108 = vmatpush1.bf16.msra.mxu0 %v731
    %1109 = vmatprep.subr.bf16.mxu0 0
    %1110 = vmatpush1.bf16.msra.mxu0 %v732
    %1111 = vmatprep.subr.bf16.mxu0 0
    %1112 = vmatpush1.bf16.msra.mxu0 %v733
    %1113 = vmatprep.subr.bf16.mxu0 0
    %1114 = vmatpush1.bf16.msra.mxu0 %v734
    %1115 = vmatprep.subr.bf16.mxu0 0
    %1116 = vmatpush1.bf16.msra.mxu0 %v735
    %1117 = vmatprep.subr.bf16.mxu0 0
    %1118 = vmatpush1.bf16.msra.mxu0 %v736
    %1119 = vmatprep.subr.bf16.mxu0 0
    %1120 = vmatpush1.bf16.msra.mxu0 %v737
    %1121 = vmatprep.subr.bf16.mxu0 0
    %1122 = vmatpush1.bf16.msra.mxu0 %v738
    %1123 = vmatprep.subr.bf16.mxu0 0
    %1124 = vmatpush1.bf16.msra.mxu0 %v739
    %1125 = vmatprep.subr.bf16.mxu0 0
    %1126 = vmatpush1.bf16.msra.mxu0 %v740
    %1127 = vmatprep.subr.bf16.mxu0 0
    %1128 = vmatpush1.bf16.msra.mxu0 %v741
    %1129 = vmatprep.mubr.bf16.mxu0 %v237
    %1130 = vmatmul.mubr.bf16.gmra.mrb[0].mxu0 %v236
    %v1131 = vpop.f32.mrb[0].mxu0
    %v1132 = vadd.f32 %v1035, %v1131
    %v1133 = vpop.f32.mrb[0].mxu0
    %v1134 = vpop.f32.mrb[0].mxu0
    %v1135 = vadd.f32 %v1038, %v1134
    %v1136 = vpop.f32.mrb[0].mxu0
    %1137 = vmatprep.mubr.bf16.mxu0 %v245
    %1138 = vmatmul.mubr.bf16.gmra.mrb[0].mxu0 %v244
    %v1139 = vpop.f32.mrb[0].mxu0
    %v1140 = vadd.f32 %v1043, %v1139
    %v1141 = vpop.f32.mrb[0].mxu0
    %v1142 = vpop.f32.mrb[0].mxu0
    %v1143 = vadd.f32 %v1046, %v1142
    %v1144 = vpop.f32.mrb[0].mxu0
    %1145 = vmatprep.mubr.bf16.mxu0 %v253
    %1146 = vmatmul.mubr.bf16.gmra.mrb[0].mxu0 %v252
    %v1147 = vpop.f32.mrb[0].mxu0
    %v1148 = vadd.f32 %v1051, %v1147
    %v1149 = vpop.f32.mrb[0].mxu0
    %v1150 = vpop.f32.mrb[0].mxu0
    %v1151 = vadd.f32 %v1054, %v1150
    %v1152 = vpop.f32.mrb[0].mxu0
    %1153 = vmatprep.mubr.bf16.mxu0 %v261
    %1154 = vmatmul.mubr.bf16.gmra.mrb[0].mxu0 %v260
    %v1155 = vpop.f32.mrb[0].mxu0
    %v1156 = vadd.f32 %v1059, %v1155
    %v1157 = vpop.f32.mrb[0].mxu0
    %v1158 = vpop.f32.mrb[0].mxu0
    %v1159 = vadd.f32 %v1062, %v1158
    %v1160 = vpop.f32.mrb[0].mxu0
    %1161 = vmatprep.mubr.bf16.mxu0 %v269
    %1162 = vmatmul.mubr.bf16.gmra.mrb[0].mxu0 %v268
    %v1163 = vpop.f32.mrb[0].mxu0
    %v1164 = vadd.f32 %v1067, %v1163
    %v1165 = vpop.f32.mrb[0].mxu0
    %v1166 = vpop.f32.mrb[0].mxu0
    %v1167 = vadd.f32 %v1070, %v1166
    %v1168 = vpop.f32.mrb[0].mxu0
    %1169 = vmatprep.mubr.bf16.mxu0 %v277
    %1170 = vmatmul.mubr.bf16.gmra.mrb[0].mxu0 %v276
    %v1171 = vpop.f32.mrb[0].mxu0
    %v1172 = vadd.f32 %v1075, %v1171
    %v1173 = vpop.f32.mrb[0].mxu0
    %v1174 = vpop.f32.mrb[0].mxu0
    %v1175 = vadd.f32 %v1078, %v1174
    %v1176 = vpop.f32.mrb[0].mxu0
    %1177 = vmatprep.mubr.bf16.mxu0 %v285
    %1178 = vmatmul.mubr.bf16.gmra.mrb[0].mxu0 %v284
    %v1179 = vpop.f32.mrb[0].mxu0
    %v1180 = vadd.f32 %v1083, %v1179
    %v1181 = vpop.f32.mrb[0].mxu0
    %v1182 = vpop.f32.mrb[0].mxu0
    %v1183 = vadd.f32 %v1086, %v1182
    %v1184 = vpop.f32.mrb[0].mxu0
    %1185 = vmatprep.mubr.bf16.mxu0 %v293
    %1186 = vmatmul.mubr.bf16.gmra.mrb[0].mxu0 %v292
    %v1187 = vpop.f32.mrb[0].mxu0
    %v1188 = vadd.f32 %v1091, %v1187
    %v1189 = vpop.f32.mrb[0].mxu0
    %v1190 = vpop.f32.mrb[0].mxu0
    %v1191 = vadd.f32 %v1094, %v1190
    %v1192 = vpop.f32.mrb[0].mxu0
    %1193 = vdwg.mxu0
    %v1194 = vadd.f32 %v86, %v1132
    %v1195 = vadd.f32 %v87, %v1135
    %v1196 = vadd.f32 %v88, %v1140
    %v1197 = vadd.f32 %v89, %v1143
    %v1198 = vadd.f32 %v90, %v1148
    %v1199 = vadd.f32 %v91, %v1151
    %v1200 = vadd.f32 %v92, %v1156
    %v1201 = vadd.f32 %v93, %v1159
    %v1202 = vadd.f32 %v94, %v1164
    %v1203 = vadd.f32 %v95, %v1167
    %v1204 = vadd.f32 %v96, %v1172
    %v1205 = vadd.f32 %v97, %v1175
    %v1206 = vadd.f32 %v98, %v1180
    %v1207 = vadd.f32 %v99, %v1183
    %v1208 = vadd.f32 %v100, %v1188
    %v1209 = vadd.f32 %v101, %v1191
    %1210 = vst [vmem:[#allocation2] sm:$0xff] %v1194
    %1211 = vst [vmem:[#allocation2 + $0x8] sm:$0xff] %v1195
    %1212 = vst [vmem:[#allocation2 + $0x10] sm:$0xff] %v1196
    %1213 = vst [vmem:[#allocation2 + $0x18] sm:$0xff] %v1197
    %1214 = vst [vmem:[#allocation2 + $0x20] sm:$0xff] %v1198
    %1215 = vst [vmem:[#allocation2 + $0x28] sm:$0xff] %v1199
    %1216 = vst [vmem:[#allocation2 + $0x30] sm:$0xff] %v1200
    %1217 = vst [vmem:[#allocation2 + $0x38] sm:$0xff] %v1201
    %1218 = vst [vmem:[#allocation2 + $0x40] sm:$0xff] %v1202
    %1219 = vst [vmem:[#allocation2 + $0x48] sm:$0xff] %v1203
    %1220 = vst [vmem:[#allocation2 + $0x50] sm:$0xff] %v1204
    %1221 = vst [vmem:[#allocation2 + $0x58] sm:$0xff] %v1205
    %1222 = vst [vmem:[#allocation2 + $0x60] sm:$0xff] %v1206
    %1223 = vst [vmem:[#allocation2 + $0x68] sm:$0xff] %v1207
    %1224 = vst [vmem:[#allocation2 + $0x70] sm:$0xff] %v1208
    %1225 = vst [vmem:[#allocation2 + $0x78] sm:$0xff] %v1209
    // Predicated region
    $region42: #{tpu_custom_call.1} parent=1 // pred_check
      %p1226 = pneg %p66
    $region43: #{tpu_custom_call.1} parent=1 // pred_check_branch
      %1228 = sbr.rel (%p1226) target = $region45
    $region44: #{tpu_custom_call.1} parent=1 // pred_region
      %v1229 = vld [vmem:[#allocation2] sm:$0xff]
      %v1230 = vld [vmem:[#allocation2 + $0x8] sm:$0xff]
      %v1231 = vld [vmem:[#allocation2 + $0x10] sm:$0xff]
      %v1232 = vld [vmem:[#allocation2 + $0x18] sm:$0xff]
      %v1233 = vld [vmem:[#allocation2 + $0x20] sm:$0xff]
      %v1234 = vld [vmem:[#allocation2 + $0x28] sm:$0xff]
      %v1235 = vld [vmem:[#allocation2 + $0x30] sm:$0xff]
      %v1236 = vld [vmem:[#allocation2 + $0x38] sm:$0xff]
      %v1237 = vld [vmem:[#allocation2 + $0x40] sm:$0xff]
      %v1238 = vld [vmem:[#allocation2 + $0x48] sm:$0xff]
      %v1239 = vld [vmem:[#allocation2 + $0x50] sm:$0xff]
      %v1240 = vld [vmem:[#allocation2 + $0x58] sm:$0xff]
      %v1241 = vld [vmem:[#allocation2 + $0x60] sm:$0xff]
      %v1242 = vld [vmem:[#allocation2 + $0x68] sm:$0xff]
      %v1243 = vld [vmem:[#allocation2 + $0x70] sm:$0xff]
      %v1244 = vld [vmem:[#allocation2 + $0x78] sm:$0xff]
      %v1245 = vld [vmem:[%s2] sm:$0x1]
      %v1247 = vlaneseq
      %v1248 = vshrl.u32 %v1247, 7
      %v1249 = vsub.s32 0, %v1248
      %v1250 = vrot.slane %v1245, %v1249
      %v1252 = vadd.f32 %v1229, %v1250
      %v1253 = vadd.f32 %v1230, %v1250
      %v1254 = vadd.f32 %v1231, %v1250
      %v1255 = vadd.f32 %v1232, %v1250
      %v1256 = vadd.f32 %v1233, %v1250
      %v1257 = vadd.f32 %v1234, %v1250
      %v1258 = vadd.f32 %v1235, %v1250
      %v1259 = vadd.f32 %v1236, %v1250
      %v1260 = vadd.f32 %v1237, %v1250
      %v1261 = vadd.f32 %v1238, %v1250
      %v1262 = vadd.f32 %v1239, %v1250
      %v1263 = vadd.f32 %v1240, %v1250
      %v1264 = vadd.f32 %v1241, %v1250
      %v1265 = vadd.f32 %v1242, %v1250
      %v1266 = vadd.f32 %v1243, %v1250
      %v1267 = vadd.f32 %v1244, %v1250
      %v1268 = vmax.f32 %v1252, 0.0
      %v1269 = vmax.f32 %v1253, 0.0
      %v1270 = vmax.f32 %v1254, 0.0
      %v1271 = vmax.f32 %v1255, 0.0
      %v1272 = vmax.f32 %v1256, 0.0
      %v1273 = vmax.f32 %v1257, 0.0
      %v1274 = vmax.f32 %v1258, 0.0
      %v1275 = vmax.f32 %v1259, 0.0
      %v1276 = vmax.f32 %v1260, 0.0
      %v1277 = vmax.f32 %v1261, 0.0
      %v1278 = vmax.f32 %v1262, 0.0
      %v1279 = vmax.f32 %v1263, 0.0
      %v1280 = vmax.f32 %v1264, 0.0
      %v1281 = vmax.f32 %v1265, 0.0
      %v1282 = vmax.f32 %v1266, 0.0
      %v1283 = vmax.f32 %v1267, 0.0
      %v1284 = vpack.c.bf16 %v1269, %v1268
      %v1285 = vpack.c.bf16 %v1271, %v1270
      %v1286 = vpack.c.bf16 %v1273, %v1272
      %v1287 = vpack.c.bf16 %v1275, %v1274
      %v1288 = vpack.c.bf16 %v1277, %v1276
      %v1289 = vpack.c.bf16 %v1279, %v1278
      %v1290 = vpack.c.bf16 %v1281, %v1280
      %v1291 = vpack.c.bf16 %v1283, %v1282
      %v1292 = vld [vmem:[#allocation8] sm:$0xf]
      %v1293 = vld [vmem:[#allocation8 + $0x4] sm:$0xf]
      %v1294 = vld [vmem:[#allocation8 + $0x8] sm:$0xf]
      %v1295 = vld [vmem:[#allocation8 + $0xc] sm:$0xf]
      %v1296 = vld [vmem:[#allocation8 + $0x10] sm:$0xf]
      %v1297 = vld [vmem:[#allocation8 + $0x14] sm:$0xf]
      %v1298 = vld [vmem:[#allocation8 + $0x18] sm:$0xf]
      %v1299 = vld [vmem:[#allocation8 + $0x1c] sm:$0xf]
      %v1300 = vld [vmem:[#allocation8 + $0x20] sm:$0xf]
      %v1301 = vld [vmem:[#allocation8 + $0x24] sm:$0xf]
      %v1302 = vld [vmem:[#allocation8 + $0x28] sm:$0xf]
      %v1303 = vld [vmem:[#allocation8 + $0x2c] sm:$0xf]
      %v1304 = vld [vmem:[#allocation8 + $0x30] sm:$0xf]
      %v1305 = vld [vmem:[#allocation8 + $0x34] sm:$0xf]
      %v1306 = vld [vmem:[#allocation8 + $0x38] sm:$0xf]
      %v1307 = vld [vmem:[#allocation8 + $0x3c] sm:$0xf]
      %v1308 = vld [vmem:[%s4] sm:$0x1]
      %v1310 = vlaneseq
      %v1311 = vshrl.u32 %v1310, 7
      %v1312 = vsub.s32 0, %v1311
      %v1313 = vrot.slane %v1308, %v1312
      %v1331 = vunpack.c.l.b16 %v1292
      %v1332 = vunpack.c.l.b16 %v1293
      %v1333 = vunpack.c.l.b16 %v1294
      %v1334 = vunpack.c.l.b16 %v1295
      %v1335 = vunpack.c.l.b16 %v1296
      %v1336 = vunpack.c.l.b16 %v1297
      %v1337 = vunpack.c.l.b16 %v1298
      %v1338 = vunpack.c.l.b16 %v1299
      %v1339 = vunpack.c.l.b16 %v1300
      %v1340 = vunpack.c.l.b16 %v1301
      %v1341 = vunpack.c.l.b16 %v1302
      %v1342 = vunpack.c.l.b16 %v1303
      %v1343 = vunpack.c.l.b16 %v1304
      %v1344 = vunpack.c.l.b16 %v1305
      %v1345 = vunpack.c.l.b16 %v1306
      %v1346 = vunpack.c.l.b16 %v1307
      %v1347 = vpack.c.b16 %v1332, %v1331
      %v1348 = vpack.c.b16 %v1334, %v1333
      %v1349 = vpack.c.b16 %v1336, %v1335
      %v1350 = vpack.c.b16 %v1338, %v1337
      %v1351 = vpack.c.b16 %v1340, %v1339
      %v1352 = vpack.c.b16 %v1342, %v1341
      %v1353 = vpack.c.b16 %v1344, %v1343
      %v1354 = vpack.c.b16 %v1346, %v1345
      %1363 = vmatprep.subr.bf16.mxu0 0
      %1364 = vmatpush1.bf16.msra.mxu0 %v1347
      %1365 = vmatprep.subr.bf16.mxu0 0
      %1366 = vmatpush1.bf16.msra.mxu0 %v1348
      %1367 = vmatprep.subr.bf16.mxu0 0
      %1368 = vmatpush1.bf16.msra.mxu0 %v1349
      %1369 = vmatprep.subr.bf16.mxu0 0
      %1370 = vmatpush1.bf16.msra.mxu0 %v1350
      %1371 = vmatprep.subr.bf16.mxu0 0
      %1372 = vmatpush1.bf16.msra.mxu0 %v1351
      %1373 = vmatprep.subr.bf16.mxu0 0
      %1374 = vmatpush1.bf16.msra.mxu0 %v1352
      %1375 = vmatprep.subr.bf16.mxu0 0
      %1376 = vmatpush1.bf16.msra.mxu0 %v1353
      %1377 = vmatprep.subr.bf16.mxu0 0
      %1378 = vmatpush1.bf16.msra.mxu0 %v1354
      %1379 = vmatprep.subr.bf16.mxu0 0
      %1380 = vmatpush1.bf16.msra.mxu0 0
      %1381 = vmatprep.subr.bf16.mxu0 0
      %1382 = vmatpush1.bf16.msra.mxu0 0
      %1383 = vmatprep.subr.bf16.mxu0 0
      %1384 = vmatpush1.bf16.msra.mxu0 0
      %1385 = vmatprep.subr.bf16.mxu0 0
      %1386 = vmatpush1.bf16.msra.mxu0 0
      %1387 = vmatprep.subr.bf16.mxu0 0
      %1388 = vmatpush1.bf16.msra.mxu0 0
      %1389 = vmatprep.subr.bf16.mxu0 0
      %1390 = vmatpush1.bf16.msra.mxu0 0
      %1391 = vmatprep.subr.bf16.mxu0 0
      %1392 = vmatpush1.bf16.msra.mxu0 0
      %1393 = vmatprep.subr.bf16.mxu0 0
      %1394 = vmatpush1.bf16.msra.mxu0 0
      %1395 = vmatprep.mubr.bf16.mxu0 0
      %1396 = vmatmul.mubr.bf16.gmra.mrb[0].mxu0 %v1284
      %v1397 = vpop.f32.mrb[0].mxu0
      %v1398 = vadd.f32 %v1313, %v1397
      %v1399 = vpop.f32.mrb[0].mxu0
      %v1400 = vpop.f32.mrb[0].mxu0
      %v1401 = vadd.f32 %v1313, %v1400
      %v1402 = vpop.f32.mrb[0].mxu0
      %1403 = vmatprep.mubr.bf16.mxu0 0
      %1404 = vmatmul.mubr.bf16.gmra.mrb[0].mxu0 %v1285
      %v1405 = vpop.f32.mrb[0].mxu0
      %v1406 = vadd.f32 %v1313, %v1405
      %v1407 = vpop.f32.mrb[0].mxu0
      %v1408 = vpop.f32.mrb[0].mxu0
      %v1409 = vadd.f32 %v1313, %v1408
      %v1410 = vpop.f32.mrb[0].mxu0
      %1411 = vmatprep.mubr.bf16.mxu0 0
      %1412 = vmatmul.mubr.bf16.gmra.mrb[0].mxu0 %v1286
      %v1413 = vpop.f32.mrb[0].mxu0
      %v1414 = vadd.f32 %v1313, %v1413
      %v1415 = vpop.f32.mrb[0].mxu0
      %v1416 = vpop.f32.mrb[0].mxu0
      %v1417 = vadd.f32 %v1313, %v1416
      %v1418 = vpop.f32.mrb[0].mxu0
      %1419 = vmatprep.mubr.bf16.mxu0 0
      %1420 = vmatmul.mubr.bf16.gmra.mrb[0].mxu0 %v1287
      %v1421 = vpop.f32.mrb[0].mxu0
      %v1422 = vadd.f32 %v1313, %v1421
      %v1423 = vpop.f32.mrb[0].mxu0
      %v1424 = vpop.f32.mrb[0].mxu0
      %v1425 = vadd.f32 %v1313, %v1424
      %v1426 = vpop.f32.mrb[0].mxu0
      %1427 = vmatprep.mubr.bf16.mxu0 0
      %1428 = vmatmul.mubr.bf16.gmra.mrb[0].mxu0 %v1288
      %v1429 = vpop.f32.mrb[0].mxu0
      %v1430 = vadd.f32 %v1313, %v1429
      %v1431 = vpop.f32.mrb[0].mxu0
      %v1432 = vpop.f32.mrb[0].mxu0
      %v1433 = vadd.f32 %v1313, %v1432
      %v1434 = vpop.f32.mrb[0].mxu0
      %1435 = vmatprep.mubr.bf16.mxu0 0
      %1436 = vmatmul.mubr.bf16.gmra.mrb[0].mxu0 %v1289
      %v1437 = vpop.f32.mrb[0].mxu0
      %v1438 = vadd.f32 %v1313, %v1437
      %v1439 = vpop.f32.mrb[0].mxu0
      %v1440 = vpop.f32.mrb[0].mxu0
      %v1441 = vadd.f32 %v1313, %v1440
      %v1442 = vpop.f32.mrb[0].mxu0
      %1443 = vmatprep.mubr.bf16.mxu0 0
      %1444 = vmatmul.mubr.bf16.gmra.mrb[0].mxu0 %v1290
      %v1445 = vpop.f32.mrb[0].mxu0
      %v1446 = vadd.f32 %v1313, %v1445
      %v1447 = vpop.f32.mrb[0].mxu0
      %v1448 = vpop.f32.mrb[0].mxu0
      %v1449 = vadd.f32 %v1313, %v1448
      %v1450 = vpop.f32.mrb[0].mxu0
      %1451 = vmatprep.mubr.bf16.mxu0 0
      %1452 = vmatmul.mubr.bf16.gmra.mrb[0].mxu0 %v1291
      %v1453 = vpop.f32.mrb[0].mxu0
      %v1454 = vadd.f32 %v1313, %v1453
      %v1455 = vpop.f32.mrb[0].mxu0
      %v1456 = vpop.f32.mrb[0].mxu0
      %v1457 = vadd.f32 %v1313, %v1456
      %v1458 = vpop.f32.mrb[0].mxu0
      %1459 = vdwg.mxu0
      %1460 = vmax.xlane.f32.xlu0 %v1398
      %v1461 = vpop.xlane.xlu0 %1460
      %1462 = vmax.xlane.f32.xlu0 %v1401
      %v1463 = vpop.xlane.xlu0 %1462
      %1464 = vmax.xlane.f32.xlu0 %v1406
      %v1465 = vpop.xlane.xlu0 %1464
      %1466 = vmax.xlane.f32.xlu0 %v1409
      %v1467 = vpop.xlane.xlu0 %1466
      %1468 = vmax.xlane.f32.xlu0 %v1414
      %v1469 = vpop.xlane.xlu0 %1468
      %1470 = vmax.xlane.f32.xlu0 %v1417
      %v1471 = vpop.xlane.xlu0 %1470
      %1472 = vmax.xlane.f32.xlu0 %v1422
      %v1473 = vpop.xlane.xlu0 %1472
      %1474 = vmax.xlane.f32.xlu0 %v1425
      %v1475 = vpop.xlane.xlu0 %1474
      %1476 = vmax.xlane.f32.xlu0 %v1430
      %v1477 = vpop.xlane.xlu0 %1476
      %1478 = vmax.xlane.f32.xlu0 %v1433
      %v1479 = vpop.xlane.xlu0 %1478
      %1480 = vmax.xlane.f32.xlu0 %v1438
      %v1481 = vpop.xlane.xlu0 %1480
      %1482 = vmax.xlane.f32.xlu0 %v1441
      %v1483 = vpop.xlane.xlu0 %1482
      %1484 = vmax.xlane.f32.xlu0 %v1446
      %v1485 = vpop.xlane.xlu0 %1484
      %1486 = vmax.xlane.f32.xlu0 %v1449
      %v1487 = vpop.xlane.xlu0 %1486
      %1488 = vmax.xlane.f32.xlu0 %v1454
      %v1489 = vpop.xlane.xlu0 %1488
      %1490 = vmax.xlane.f32.xlu0 %v1457
      %v1491 = vpop.xlane.xlu0 %1490
      %v1492 = vsub.f32 %v1398, %v1461
      %v1493 = vsub.f32 %v1401, %v1463
      %v1494 = vsub.f32 %v1406, %v1465
      %v1495 = vsub.f32 %v1409, %v1467
      %v1496 = vsub.f32 %v1414, %v1469
      %v1497 = vsub.f32 %v1417, %v1471
      %v1498 = vsub.f32 %v1422, %v1473
      %v1499 = vsub.f32 %v1425, %v1475
      %v1500 = vsub.f32 %v1430, %v1477
      %v1501 = vsub.f32 %v1433, %v1479
      %v1502 = vsub.f32 %v1438, %v1481
      %v1503 = vsub.f32 %v1441, %v1483
      %v1504 = vsub.f32 %v1446, %v1485
      %v1505 = vsub.f32 %v1449, %v1487
      %v1506 = vsub.f32 %v1454, %v1489
      %v1507 = vsub.f32 %v1457, %v1491
      %v1508 = vmul.f32 %v1492, 1.442695
      %v1509 = vpow.pop %v1508
      %v1510 = vmul.f32 %v1493, 1.442695
      %v1511 = vpow.pop %v1510
      %v1512 = vmul.f32 %v1494, 1.442695
      %v1513 = vpow.pop %v1512
      %v1514 = vmul.f32 %v1495, 1.442695
      %v1515 = vpow.pop %v1514
      %v1516 = vmul.f32 %v1496, 1.442695
      %v1517 = vpow.pop %v1516
      %v1518 = vmul.f32 %v1497, 1.442695
      %v1519 = vpow.pop %v1518
      %v1520 = vmul.f32 %v1498, 1.442695
      %v1521 = vpow.pop %v1520
      %v1522 = vmul.f32 %v1499, 1.442695
      %v1523 = vpow.pop %v1522
      %v1524 = vmul.f32 %v1500, 1.442695
      %v1525 = vpow.pop %v1524
      %v1526 = vmul.f32 %v1501, 1.442695
      %v1527 = vpow.pop %v1526
      %v1528 = vmul.f32 %v1502, 1.442695
      %v1529 = vpow.pop %v1528
      %v1530 = vmul.f32 %v1503, 1.442695
      %v1531 = vpow.pop %v1530
      %v1532 = vmul.f32 %v1504, 1.442695
      %v1533 = vpow.pop %v1532
      %v1534 = vmul.f32 %v1505, 1.442695
      %v1535 = vpow.pop %v1534
      %v1536 = vmul.f32 %v1506, 1.442695
      %v1537 = vpow.pop %v1536
      %v1538 = vmul.f32 %v1507, 1.442695
      %v1539 = vpow.pop %v1538
      %v1540 = vld [vmem:[%s5] sm:$0x1]
      %v1542 = vlaneseq
      %v1543 = vshrl.u32 %v1542, 7
      %v1544 = vsub.s32 0, %v1543
      %v1545 = vrot.slane %v1540, %v1544
      %v1547 = vmul.f32 %v1509, %v1545
      %v1548 = vmul.f32 %v1511, %v1545
      %v1549 = vmul.f32 %v1513, %v1545
      %v1550 = vmul.f32 %v1515, %v1545
      %v1551 = vmul.f32 %v1517, %v1545
      %v1552 = vmul.f32 %v1519, %v1545
      %v1553 = vmul.f32 %v1521, %v1545
      %v1554 = vmul.f32 %v1523, %v1545
      %v1555 = vmul.f32 %v1525, %v1545
      %v1556 = vmul.f32 %v1527, %v1545
      %v1557 = vmul.f32 %v1529, %v1545
      %v1558 = vmul.f32 %v1531, %v1545
      %v1559 = vmul.f32 %v1533, %v1545
      %v1560 = vmul.f32 %v1535, %v1545
      %v1561 = vmul.f32 %v1537, %v1545
      %v1562 = vmul.f32 %v1539, %v1545
      %1563 = vadd.xlane.f32.xlu0 %v1547
      %v1564 = vpop.xlane.xlu0 %1563
      %1565 = vadd.xlane.f32.xlu0 %v1548
      %v1566 = vpop.xlane.xlu0 %1565
      %1567 = vadd.xlane.f32.xlu0 %v1549
      %v1568 = vpop.xlane.xlu0 %1567
      %1569 = vadd.xlane.f32.xlu0 %v1550
      %v1570 = vpop.xlane.xlu0 %1569
      %1571 = vadd.xlane.f32.xlu0 %v1551
      %v1572 = vpop.xlane.xlu0 %1571
      %1573 = vadd.xlane.f32.xlu0 %v1552
      %v1574 = vpop.xlane.xlu0 %1573
      %1575 = vadd.xlane.f32.xlu0 %v1553
      %v1576 = vpop.xlane.xlu0 %1575
      %1577 = vadd.xlane.f32.xlu0 %v1554
      %v1578 = vpop.xlane.xlu0 %1577
      %1579 = vadd.xlane.f32.xlu0 %v1555
      %v1580 = vpop.xlane.xlu0 %1579
      %1581 = vadd.xlane.f32.xlu0 %v1556
      %v1582 = vpop.xlane.xlu0 %1581
      %1583 = vadd.xlane.f32.xlu0 %v1557
      %v1584 = vpop.xlane.xlu0 %1583
      %1585 = vadd.xlane.f32.xlu0 %v1558
      %v1586 = vpop.xlane.xlu0 %1585
      %1587 = vadd.xlane.f32.xlu0 %v1559
      %v1588 = vpop.xlane.xlu0 %1587
      %1589 = vadd.xlane.f32.xlu0 %v1560
      %v1590 = vpop.xlane.xlu0 %1589
      %1591 = vadd.xlane.f32.xlu0 %v1561
      %v1592 = vpop.xlane.xlu0 %1591
      %1593 = vadd.xlane.f32.xlu0 %v1562
      %v1594 = vpop.xlane.xlu0 %1593
      %1595 = vadd.xlane.f32.xlu0 %v1509
      %v1596 = vpop.xlane.xlu0 %1595
      %1597 = vadd.xlane.f32.xlu0 %v1511
      %v1598 = vpop.xlane.xlu0 %1597
      %1599 = vadd.xlane.f32.xlu0 %v1513
      %v1600 = vpop.xlane.xlu0 %1599
      %1601 = vadd.xlane.f32.xlu0 %v1515
      %v1602 = vpop.xlane.xlu0 %1601
      %1603 = vadd.xlane.f32.xlu0 %v1517
      %v1604 = vpop.xlane.xlu0 %1603
      %1605 = vadd.xlane.f32.xlu0 %v1519
      %v1606 = vpop.xlane.xlu0 %1605
      %1607 = vadd.xlane.f32.xlu0 %v1521
      %v1608 = vpop.xlane.xlu0 %1607
      %1609 = vadd.xlane.f32.xlu0 %v1523
      %v1610 = vpop.xlane.xlu0 %1609
      %1611 = vadd.xlane.f32.xlu0 %v1525
      %v1612 = vpop.xlane.xlu0 %1611
      %1613 = vadd.xlane.f32.xlu0 %v1527
      %v1614 = vpop.xlane.xlu0 %1613
      %1615 = vadd.xlane.f32.xlu0 %v1529
      %v1616 = vpop.xlane.xlu0 %1615
      %1617 = vadd.xlane.f32.xlu0 %v1531
      %v1618 = vpop.xlane.xlu0 %1617
      %1619 = vadd.xlane.f32.xlu0 %v1533
      %v1620 = vpop.xlane.xlu0 %1619
      %1621 = vadd.xlane.f32.xlu0 %v1535
      %v1622 = vpop.xlane.xlu0 %1621
      %1623 = vadd.xlane.f32.xlu0 %v1537
      %v1624 = vpop.xlane.xlu0 %1623
      %1625 = vadd.xlane.f32.xlu0 %v1539
      %v1626 = vpop.xlane.xlu0 %1625
      %v1627 = vrcp.pop %v1596
      %v1628 = vrcp.pop %v1598
      %v1629 = vrcp.pop %v1600
      %v1630 = vrcp.pop %v1602
      %v1631 = vrcp.pop %v1604
      %v1632 = vrcp.pop %v1606
      %v1633 = vrcp.pop %v1608
      %v1634 = vrcp.pop %v1610
      %v1635 = vrcp.pop %v1612
      %v1636 = vrcp.pop %v1614
      %v1637 = vrcp.pop %v1616
      %v1638 = vrcp.pop %v1618
      %v1639 = vrcp.pop %v1620
      %v1640 = vrcp.pop %v1622
      %v1641 = vrcp.pop %v1624
      %v1642 = vrcp.pop %v1626
      %v1643 = vmul.f32 %v1564, %v1627
      %v1644 = vmul.f32 %v1566, %v1628
      %v1645 = vmul.f32 %v1568, %v1629
      %v1646 = vmul.f32 %v1570, %v1630
      %v1647 = vmul.f32 %v1572, %v1631
      %v1648 = vmul.f32 %v1574, %v1632
      %v1649 = vmul.f32 %v1576, %v1633
      %v1650 = vmul.f32 %v1578, %v1634
      %v1651 = vmul.f32 %v1580, %v1635
      %v1652 = vmul.f32 %v1582, %v1636
      %v1653 = vmul.f32 %v1584, %v1637
      %v1654 = vmul.f32 %v1586, %v1638
      %v1655 = vmul.f32 %v1588, %v1639
      %v1656 = vmul.f32 %v1590, %v1640
      %v1657 = vmul.f32 %v1592, %v1641
      %v1658 = vmul.f32 %v1594, %v1642
      %1659 = vxpose.xlu0.b32.start [1/16] %v1643, 128
      %1660 = vxpose.xlu0.b32.cont [2/16] %v1644, 128
      %1661 = vxpose.xlu0.b32.cont [3/16] %v1645, 128
      %1662 = vxpose.xlu0.b32.cont [4/16] %v1646, 128
      %1663 = vxpose.xlu0.b32.cont [5/16] %v1647, 128
      %1664 = vxpose.xlu0.b32.cont [6/16] %v1648, 128
      %1665 = vxpose.xlu0.b32.cont [7/16] %v1649, 128
      %1666 = vxpose.xlu0.b32.cont [8/16] %v1650, 128
      %1667 = vxpose.xlu0.b32.cont [9/16] %v1651, 128
      %1668 = vxpose.xlu0.b32.cont [10/16] %v1652, 128
      %1669 = vxpose.xlu0.b32.cont [11/16] %v1653, 128
      %1670 = vxpose.xlu0.b32.cont [12/16] %v1654, 128
      %1671 = vxpose.xlu0.b32.cont [13/16] %v1655, 128
      %1672 = vxpose.xlu0.b32.cont [14/16] %v1656, 128
      %1673 = vxpose.xlu0.b32.cont [15/16] %v1657, 128
      %1674 = vxpose.xlu0.b32.end [16/16] %v1658, 128
      %v1675 = vpop.trf.xlu0
      %v1676 = vpop.trf.xlu0
      %v1677 = vpop.trf.xlu0
      %v1678 = vpop.trf.xlu0
      %v1679 = vpop.trf.xlu0
      %v1680 = vpop.trf.xlu0
      %v1681 = vpop.trf.xlu0
      %v1682 = vpop.trf.xlu0
      %v1683 = vpop.trf.xlu0
      %v1684 = vpop.trf.xlu0
      %v1685 = vpop.trf.xlu0
      %v1686 = vpop.trf.xlu0
      %v1687 = vpop.trf.xlu0
      %v1688 = vpop.trf.xlu0
      %v1689 = vpop.trf.xlu0
      %v1690 = vpop.trf.xlu0
      %1691 = vst [vmem:[#allocation9] sm:$0x1] %v1675
    $region45: #{tpu_custom_call.1} parent=1 // pred_fallthru
      _
    // Predicated region
    $region46: #{tpu_custom_call.1} parent=1 // pred_check
      _
    $region47: #{tpu_custom_call.1} parent=1 // pred_check_branch
      %1693 = sbr.rel (0) target = $region49
    $region48: #{tpu_custom_call.1} parent=1 // pred_region
      %s1695 = ssub.s32 16, 16
      %1696 = vsyncadd [#allocation5], %s1695
      %s1698 = sshll.u32 [#allocation9], 4
      %s1699 = int_to_ptr.vmem [resolvable:$true] %s1698
      %1701 = dma.vmem_to_hbm [thread:$0]  %s1699, 16, %s6, [#allocation5]
    $region49: #{tpu_custom_call.1} parent=1 // pred_fallthru
      _
    // Predicated region
    $region50: #{tpu_custom_call.1} parent=1 // pred_check
      _
    $region51: #{tpu_custom_call.1} parent=1 // pred_check_branch
      %1703 = sbr.rel (0) target = $region53
    $region52: #{tpu_custom_call.1} parent=1 // pred_region
      %1704 = dma.done [#allocation5], 16
    $region53: #{tpu_custom_call.1} parent=1 // pred_fallthru
      _
    %1705 = vsyncpa [#allocation4], 1
    %1706 = vsyncpa [#allocation7], 1
    %1707 = vsyncpa [#allocation5], 1

</llo_original>
